<compile_context>
chip_gen: v6e
topology: v6e:2x2x1
jax: 0.10.0
libtpu: 0.0.40
codegen_flags: <defaults>
</compile_context>

<pallas_src>
import functools

import jax
import jax.numpy as jnp
from jax.experimental import pallas as pl
from jax.experimental.pallas import tpu as pltpu


def _round_up(x, m):
    return (x + m - 1) // m * m


# ----------------------------------------------------------------------------
# Fused kernel: logits + copy gate (one MXU matmul) -> softmax -> gated mix
#               -> copy matmul vs. resident src_map -> write scores tile.
# ----------------------------------------------------------------------------
def _copy_generator_kernel(hidden_ref, attn_ref, w_ref, b_ref, src_ref, out_ref,
                           *, V, SV, B, TM):
    # hidden_ref: (TM, H)  bf16      attn_ref: (TM, S)   bf16
    # w_ref:      (H, VE)  bf16      b_ref:    (1, VE)   f32   (VE = pad(V+1, 128))
    # src_ref:    (S, B*SV) bf16     out_ref:  (TM, V+SV) f32
    h = hidden_ref[...]

    # [logits | copy-gate | pad] in a single MXU matmul, f32 accumulation.
    logits_ext = jnp.dot(h, w_ref[...], preferred_element_type=jnp.float32)
    logits_ext = logits_ext + b_ref[...]
    logits = logits_ext[:, :V]                      # (TM, V)
    zc = logits_ext[:, V:V + 1]                     # (TM, 1)  = hidden @ w_copy + b_copy
    p_copy = jax.nn.sigmoid(zc)                     # (TM, 1)

    # Numerically-stable softmax; divide via EUP approx reciprocal, gate folded in.
    m = jnp.max(logits, axis=1, keepdims=True)
    e = jnp.exp(logits - m)
    ssum = jnp.sum(e, axis=1, keepdims=True)
    inv = pl.reciprocal(ssum, approx=True)
    out_ref[:, :V] = e * ((1.0 - p_copy) * inv)     # p_softmax * (1 - p(z))

    # Copy path: one big lane-dense matmul against the flattened src_map, then
    # select this row's batch chunk (b = global_row % B) and scale by p_copy.
    big = jnp.dot(attn_ref[...], src_ref[...],
                  preferred_element_type=jnp.float32)          # (TM, B*SV)
    row = pl.program_id(0) * TM + jax.lax.broadcasted_iota(jnp.int32, (TM, 1), 0)
    rowb = row % B
    cp = big[:, 0:SV]
    for bi in range(1, B):
        cp = jnp.where(rowb == bi, big[:, bi * SV:(bi + 1) * SV], cp)
    out_ref[:, V:] = cp * p_copy                    # p(z) * p_copy(w)


# ----------------------------------------------------------------------------
# Wrapper
# ----------------------------------------------------------------------------
def copy_generator_forward(hidden, attn, src_map, W, b, w_copy, b_copy,
                           *, max_block_rows=512,
                           vmem_budget_bytes=24 * 1024 * 1024):
    """
    hidden  : (N, H)    N = tlen * batch   (row index = t*batch + b)
    attn    : (N, S)
    src_map : (S, B, SV)
    W       : (H, V)    (= torch linear.weight.T)
    b       : (V,)
    w_copy  : (H,)      (= torch linear_copy.weight[0])
    b_copy  : scalar
    returns scores : (N, V + SV) float32
    """
    N, H = hidden.shape
    N2, S = attn.shape
    assert N2 == N
    S2, B, SV = src_map.shape
    assert S2 == S
    H2, V = W.shape
    assert H2 == H

    f32, bf16 = jnp.float32, jnp.bfloat16
    VE = _round_up(V + 1, 128)              # vocab + copy-gate column, lane padded

    # Extended projection: columns [0,V) = W, column V = w_copy, rest zero.
    W_ext = jnp.zeros((H, VE), f32).at[:, :V].set(W.astype(f32))
    W_ext = W_ext.at[:, V].set(w_copy.astype(f32)).astype(bf16)
    b_ext = jnp.zeros((1, VE), f32).at[0, :V].set(b.astype(f32))
    b_ext = b_ext.at[0, V].set(jnp.asarray(b_copy, f32))

    # src_map (S, B, SV) -> (S, B*SV): free row-major reshape, kept resident.
    src_flat = src_map.astype(bf16).reshape(S, B * SV)

    # ---- row-tile size from an explicit VMEM budget (v7x-safe) ----------------
    resident = 2 * (H * VE * 2 + VE * 4 + S * (B * SV) * 2)       # bf16/f32 residents
    per_row = 2 * (H * 2 + S * 2 + (V + SV) * 4)                  # double-buffered tiles
    avail = max(vmem_budget_bytes - resident, per_row * 8)
    TM = int(min(max_block_rows, max(8, (avail // per_row) // 8 * 8)))
    TM = min(TM, _round_up(N, 8))
    N_pad = _round_up(N, TM)
    grid = (N_pad // TM,)

    hid_p = hidden.astype(bf16)
    att_p = attn.astype(bf16)
    if N_pad != N:
        hid_p = jnp.pad(hid_p, ((0, N_pad - N), (0, 0)))
        att_p = jnp.pad(att_p, ((0, N_pad - N), (0, 0)))

    kernel = functools.partial(_copy_generator_kernel, V=V, SV=SV, B=B, TM=TM)

    out = pl.pallas_call(
        kernel,
        out_shape=jax.ShapeDtypeStruct((N_pad, V + SV), f32),
        grid_spec=pltpu.PrefetchScalarGridSpec(
            num_scalar_prefetch=0,
            grid=grid,
            in_specs=[
                pl.BlockSpec((TM, H), lambda i: (i, 0)),        # hidden tile
                pl.BlockSpec((TM, S), lambda i: (i, 0)),        # attn tile
                pl.BlockSpec((H, VE), lambda i: (0, 0)),        # W_ext  (resident)
                pl.BlockSpec((1, VE), lambda i: (0, 0)),        # b_ext  (resident)
                pl.BlockSpec((S, B * SV), lambda i: (0, 0)),    # src_map (resident)
            ],
            out_specs=pl.BlockSpec((TM, V + SV), lambda i: (i, 0)),
        ),
        compiler_params=pltpu.CompilerParams(
            dimension_semantics=("parallel",),
            vmem_limit_bytes=48 * 1024 * 1024,
        ),
    )(hid_p, att_p, W_ext, b_ext, src_flat)

    return out[:N] if N_pad != N else out


# ----------------------------------------------------------------------------
# Pure-JAX reference (mirrors the PyTorch forward exactly)
# ----------------------------------------------------------------------------
def copy_generator_ref(hidden, attn, src_map, W, b, w_copy, b_copy):
    N, H = hidden.shape
    S, B, SV = src_map.shape
    T = N // B
    logits = hidden @ W + b
    prob = jax.nn.softmax(logits, axis=1)
    p_copy = jax.nn.sigmoid(hidden @ w_copy.reshape(H, 1) + b_copy)
    out_prob = prob * (1.0 - p_copy)
    mul_attn = attn * p_copy
    cp = jnp.einsum('bts,bsv->btv',
                    jnp.transpose(mul_attn.reshape(T, B, S), (1, 0, 2)),
                    jnp.transpose(src_map, (1, 0, 2)))
    copy_prob = jnp.transpose(cp, (1, 0, 2)).reshape(N, SV)
    return jnp.concatenate([out_prob, copy_prob], axis=1)


if __name__ == "__main__":
    master_key = jax.random.PRNGKey(0)

    def run_case(tlen, batch, slen, hiddim, vocab, svocab, max_block_rows, key):
        N = tlen * batch
        k1, k2, k3, k4, k5, k6 = jax.random.split(key, 6)
        hidden = jax.random.normal(k1, (N, hiddim), jnp.float32)
        attn = jax.nn.softmax(jax.random.normal(k2, (N, slen), jnp.float32), axis=1)
        src_ids = jax.random.randint(k3, (slen, batch), 0, svocab)
        src_map = jax.nn.one_hot(src_ids, svocab, dtype=jnp.float32)
        bound = 1.0 / jnp.sqrt(jnp.float32(hiddim))
        W = jax.random.uniform(k4, (hiddim, vocab), jnp.float32, -bound, bound)
        b = jax.random.uniform(k5, (vocab,), jnp.float32, -bound, bound)
        w_copy = jax.random.uniform(k6, (hiddim,), jnp.float32, -bound, bound)
        b_copy = jnp.float32(0.01)

        scores = copy_generator_forward(hidden, attn, src_map, W, b, w_copy, b_copy,
                                        max_block_rows=max_block_rows)
        scores = jax.block_until_ready(scores)
        assert scores.shape == (N, vocab + svocab)

        # Reference in f32 on the same bf16-rounded inputs the kernel consumes
        # (bf16 MXU inputs + approx reciprocal => relaxed tolerance).
        rf = lambda x: x.astype(jnp.bfloat16).astype(jnp.float32)
        ref = copy_generator_ref(rf(hidden), rf(attn), rf(src_map),
                                 rf(W), b, rf(w_copy), b_copy)
        err = float(jnp.max(jnp.abs(scores - ref)))
        assert jnp.allclose(scores, ref, atol=2e-2, rtol=2e-2), \
            f"mismatch vs reference, max abs err = {err}"

    # Case 1: lane-aligned shapes, multiple row tiles (grid=(4,), TM=64).
    run_case(tlen=64, batch=4, slen=128, hiddim=128, vocab=256, svocab=128,
             max_block_rows=64, key=jax.random.fold_in(master_key, 0))
    # Case 2: ragged N / H / S (exercises row padding and odd contraction dims).
    run_case(tlen=7, batch=3, slen=72, hiddim=40, vocab=128, svocab=128,
             max_block_rows=512, key=jax.random.fold_in(master_key, 1))

    print("KERNEL_OK")
</pallas_src>

<mosaic_0001>
module attributes {stable_mosaic.version = 11 : i64} {
  func.func @_copy_generator_kernel(%arg0: i32, %arg1: memref<64x128xbf16, #tpu.memory_space<vmem>>, %arg2: memref<64x128xbf16, #tpu.memory_space<vmem>>, %arg3: memref<128x384xbf16, #tpu.memory_space<vmem>>, %arg4: memref<1x384xf32, #tpu.memory_space<vmem>>, %arg5: memref<128x512xbf16, #tpu.memory_space<vmem>>, %arg6: memref<64x384xf32, #tpu.memory_space<vmem>>) attributes {dimension_semantics = [#tpu.dimension_semantics<parallel>], iteration_bounds = array<i64: 4>, scalar_prefetch = 0 : i64, scratch_operands = 0 : i64, tpu.core_type = #tpu.core_type<tc>, window_params = [{transform_indices = @transform_0, window_bounds = array<i64: 64, 128>}, {transform_indices = @transform_1, window_bounds = array<i64: 64, 128>}, {pipeline_mode = #tpu.pipeline_mode<synchronous>, transform_indices = @transform_2, window_bounds = array<i64: 128, 384>}, {pipeline_mode = #tpu.pipeline_mode<synchronous>, transform_indices = @transform_3, window_bounds = array<i64: 1, 384>}, {pipeline_mode = #tpu.pipeline_mode<synchronous>, transform_indices = @transform_4, window_bounds = array<i64: 128, 512>}, {transform_indices = @transform_5, window_bounds = array<i64: 64, 384>}]} {
    %c0 = arith.constant 0 : index
    %c0_0 = arith.constant 0 : index
    %0 = vector.load %arg1[%c0, %c0_0] : memref<64x128xbf16, #tpu.memory_space<vmem>>, vector<64x128xbf16>
    %c0_1 = arith.constant 0 : index
    %c0_2 = arith.constant 0 : index
    %1 = vector.load %arg3[%c0_1, %c0_2] : memref<128x384xbf16, #tpu.memory_space<vmem>>, vector<128x384xbf16>
    %cst = arith.constant dense<0.000000e+00> : vector<64x384xf32>
    %2 = tpu.matmul %0, %1, %cst {dimension_numbers = #tpu.dot_dimension_numbers<[1], [0], [0], [1], [0, 0, 1, 1], [], []>} : vector<64x128xbf16>, vector<128x384xbf16>, vector<64x384xf32> -> vector<64x384xf32>
    %c0_3 = arith.constant 0 : index
    %c0_4 = arith.constant 0 : index
    %3 = vector.load %arg4[%c0_3, %c0_4] : memref<1x384xf32, #tpu.memory_space<vmem>>, vector<1x384xf32>
    %4 = vector.broadcast %3 : vector<1x384xf32> to vector<64x384xf32>
    %5 = arith.addf %2, %4 : vector<64x384xf32>
    %6 = vector.extract_strided_slice %5 {offsets = [0, 0], sizes = [64, 256], strides = [1, 1]} : vector<64x384xf32> to vector<64x256xf32>
    %7 = vector.extract_strided_slice %5 {offsets = [0, 256], sizes = [64, 1], strides = [1, 1]} : vector<64x384xf32> to vector<64x1xf32>
    %8 = arith.negf %7 : vector<64x1xf32>
    %9 = math.exp %8 : vector<64x1xf32>
    %cst_5 = arith.constant 1.000000e+00 : f32
    %10 = vector.broadcast %cst_5 : f32 to vector<64x1xf32>
    %11 = arith.addf %10, %9 : vector<64x1xf32>
    %12 = arith.divf %10, %11 : vector<64x1xf32>
    %cst_6 = arith.constant dense<0xFF800000> : vector<64xf32>
    %13 = vector.multi_reduction <maximumf>, %6, %cst_6 [1] : vector<64x256xf32> to vector<64xf32>
    %14 = vector.shape_cast %13 : vector<64xf32> to vector<64x1xf32>
    %15 = vector.broadcast %14 : vector<64x1xf32> to vector<64x256xf32>
    %16 = arith.subf %6, %15 : vector<64x256xf32>
    %17 = math.exp %16 : vector<64x256xf32>
    %cst_7 = arith.constant dense<0.000000e+00> : vector<64xf32>
    %18 = vector.multi_reduction <add>, %17, %cst_7 [1] : vector<64x256xf32> to vector<64xf32>
    %19 = vector.shape_cast %18 : vector<64xf32> to vector<64x1xf32>
    %20 = tpu.reciprocal %19 {approx = true} : vector<64x1xf32> -> vector<64x1xf32>
    %cst_8 = arith.constant 1.000000e+00 : f32
    %21 = vector.broadcast %cst_8 : f32 to vector<64x1xf32>
    %22 = arith.subf %21, %12 : vector<64x1xf32>
    %23 = arith.mulf %22, %20 : vector<64x1xf32>
    %24 = vector.broadcast %23 : vector<64x1xf32> to vector<64x256xf32>
    %25 = arith.mulf %17, %24 : vector<64x256xf32>
    %c0_9 = arith.constant 0 : index
    %c0_10 = arith.constant 0 : index
    %26 = vector.load %arg6[%c0_9, %c0_10] : memref<64x384xf32, #tpu.memory_space<vmem>>, vector<64x256xf32>
    tpu.vector_store %arg6[%c0_9, %c0_10], %25 {strides = array<i32>} : memref<64x384xf32, #tpu.memory_space<vmem>>, vector<64x256xf32>,
    %c0_11 = arith.constant 0 : index
    %c0_12 = arith.constant 0 : index
    %27 = vector.load %arg2[%c0_11, %c0_12] : memref<64x128xbf16, #tpu.memory_space<vmem>>, vector<64x128xbf16>
    %c0_13 = arith.constant 0 : index
    %c0_14 = arith.constant 0 : index
    %28 = vector.load %arg5[%c0_13, %c0_14] : memref<128x512xbf16, #tpu.memory_space<vmem>>, vector<128x512xbf16>
    %cst_15 = arith.constant dense<0.000000e+00> : vector<64x512xf32>
    %29 = tpu.matmul %27, %28, %cst_15 {dimension_numbers = #tpu.dot_dimension_numbers<[1], [0], [0], [1], [0, 0, 1, 1], [], []>} : vector<64x128xbf16>, vector<128x512xbf16>, vector<64x512xf32> -> vector<64x512xf32>
    %c64_i32 = arith.constant 64 : i32
    %30 = arith.muli %arg0, %c64_i32 : i32
    %31 = tpu.iota {dimensions = array<i32: 0>} : vector<64x1xi32>
    %32 = vector.broadcast %30 : i32 to vector<64x1xi32>
    %33 = arith.addi %32, %31 : vector<64x1xi32>
    %c4_i32 = arith.constant 4 : i32
    %c0_i32 = arith.constant 0 : i32
    %34 = arith.cmpi eq, %c4_i32, %c0_i32 : i32
    %c1_i32 = arith.constant 1 : i32
    %35 = arith.select %34, %c1_i32, %c4_i32 : i32
    %36 = vector.broadcast %35 : i32 to vector<64x1xi32>
    %37 = arith.remsi %33, %36 : vector<64x1xi32>
    %c0_i32_16 = arith.constant 0 : i32
    %38 = vector.broadcast %c0_i32_16 : i32 to vector<64x1xi32>
    %39 = arith.cmpi ne, %37, %38 : vector<64x1xi32>
    %c0_i32_17 = arith.constant 0 : i32
    %40 = vector.broadcast %c0_i32_17 : i32 to vector<64x1xi32>
    %41 = arith.cmpi slt, %37, %40 : vector<64x1xi32>
    %c0_i32_18 = arith.constant 0 : i32
    %42 = arith.cmpi slt, %35, %c0_i32_18 : i32
    %43 = vector.broadcast %42 : i1 to vector<64x1xi1>
    %44 = vector.broadcast %43 : vector<64x1xi1> to vector<64x1xi1>
    %45 = arith.xori %41, %44 : vector<64x1xi1>
    %46 = arith.andi %45, %39 : vector<64x1xi1>
    %47 = vector.broadcast %35 : i32 to vector<64x1xi32>
    %48 = arith.addi %37, %47 : vector<64x1xi32>
    %49 = arith.select %46, %48, %37 : vector<64x1xi1>, vector<64x1xi32>
    %50 = vector.extract_strided_slice %29 {offsets = [0, 0], sizes = [64, 128], strides = [1, 1]} : vector<64x512xf32> to vector<64x128xf32>
    %c1_i32_19 = arith.constant 1 : i32
    %51 = vector.broadcast %c1_i32_19 : i32 to vector<64x1xi32>
    %52 = arith.cmpi eq, %49, %51 : vector<64x1xi32>
    %53 = vector.extract_strided_slice %29 {offsets = [0, 128], sizes = [64, 128], strides = [1, 1]} : vector<64x512xf32> to vector<64x128xf32>
    %54 = vector.shape_cast %52 : vector<64x1xi1> to vector<64x1xi1>
    %55 = vector.broadcast %54 : vector<64x1xi1> to vector<64x128xi1>
    %56 = arith.select %55, %53, %50 : vector<64x128xi1>, vector<64x128xf32>
    %c2_i32 = arith.constant 2 : i32
    %57 = vector.broadcast %c2_i32 : i32 to vector<64x1xi32>
    %58 = arith.cmpi eq, %49, %57 : vector<64x1xi32>
    %59 = vector.extract_strided_slice %29 {offsets = [0, 256], sizes = [64, 128], strides = [1, 1]} : vector<64x512xf32> to vector<64x128xf32>
    %60 = vector.shape_cast %58 : vector<64x1xi1> to vector<64x1xi1>
    %61 = vector.broadcast %60 : vector<64x1xi1> to vector<64x128xi1>
    %62 = arith.select %61, %59, %56 : vector<64x128xi1>, vector<64x128xf32>
    %c3_i32 = arith.constant 3 : i32
    %63 = vector.broadcast %c3_i32 : i32 to vector<64x1xi32>
    %64 = arith.cmpi eq, %49, %63 : vector<64x1xi32>
    %65 = vector.extract_strided_slice %29 {offsets = [0, 384], sizes = [64, 128], strides = [1, 1]} : vector<64x512xf32> to vector<64x128xf32>
    %66 = vector.shape_cast %64 : vector<64x1xi1> to vector<64x1xi1>
    %67 = vector.broadcast %66 : vector<64x1xi1> to vector<64x128xi1>
    %68 = arith.select %67, %65, %62 : vector<64x128xi1>, vector<64x128xf32>
    %69 = vector.broadcast %12 : vector<64x1xf32> to vector<64x128xf32>
    %70 = arith.mulf %68, %69 : vector<64x128xf32>
    %c0_20 = arith.constant 0 : index
    %c256 = arith.constant 256 : index
    %71 = vector.load %arg6[%c0_20, %c256] : memref<64x384xf32, #tpu.memory_space<vmem>>, vector<64x128xf32>
    tpu.vector_store %arg6[%c0_20, %c256], %70 {strides = array<i32>} : memref<64x384xf32, #tpu.memory_space<vmem>>, vector<64x128xf32>,
    return
  }
  func.func @transform_0(%arg0: i32) -> (i32, i32) {
    %c0_i32 = arith.constant 0 : i32
    %c0_i32_0 = arith.constant 0 : i32
    return %arg0, %c0_i32 : i32, i32
  }
  func.func @transform_1(%arg0: i32) -> (i32, i32) {
    %c0_i32 = arith.constant 0 : i32
    %c0_i32_0 = arith.constant 0 : i32
    return %arg0, %c0_i32 : i32, i32
  }
  func.func @transform_2(%arg0: i32) -> (i32, i32) {
    %c0_i32 = arith.constant 0 : i32
    %c0_i32_0 = arith.constant 0 : i32
    %c0_i32_1 = arith.constant 0 : i32
    return %c0_i32, %c0_i32_0 : i32, i32
  }
  func.func @transform_3(%arg0: i32) -> (i32, i32) {
    %c0_i32 = arith.constant 0 : i32
    %c0_i32_0 = arith.constant 0 : i32
    %c0_i32_1 = arith.constant 0 : i32
    return %c0_i32, %c0_i32_0 : i32, i32
  }
  func.func @transform_4(%arg0: i32) -> (i32, i32) {
    %c0_i32 = arith.constant 0 : i32
    %c0_i32_0 = arith.constant 0 : i32
    %c0_i32_1 = arith.constant 0 : i32
    return %c0_i32, %c0_i32_0 : i32, i32
  }
  func.func @transform_5(%arg0: i32) -> (i32, i32) {
    %c0_i32 = arith.constant 0 : i32
    %c0_i32_0 = arith.constant 0 : i32
    return %arg0, %c0_i32 : i32, i32
  }
}

</mosaic_0001>

<llo_original>
// kernel: tpu_custom_call.1
$region0: #{tpu_custom_call.1}
  #allocation0 [shape = 'u32[]', space=smem, size = 0x4, offset = 0x4, fixed_abs, tag = 'smem constant byte address 0x4 - core index']
  #allocation1 [shape = 'u32[144,128]{1,0:T(1,128)}', space=vmem, size = 0x12000, scoped, tag = 'internal scratch']
  %s0 = inlined_call_operand.hbm [shape: bf16[256,128], index: 0, kind: input, shape index: {}]
  %s1 = inlined_call_operand.hbm [shape: bf16[256,128], index: 1, kind: input, shape index: {}]
  %s2 = inlined_call_operand.hbm [shape: bf16[128,384], index: 2, kind: input, shape index: {}]
  %s3 = inlined_call_operand.vmem [shape: f32[1,384], index: 3, kind: input, shape index: {}]
  %s4 = inlined_call_operand.hbm [shape: bf16[128,512], index: 4, kind: input, shape index: {}]
  %s5 = inlined_call_operand.hbm [shape: f32[256,384], index: 5, kind: output, shape index: {}]
  %s6 = sld [smem:[#allocation0]]
  $region69: #{tpu_custom_call.1} parent=0
    _
  %s8 = ssub.s32 1, %s6
  %s9 = scalar_select 0, %s8, %s6
  $region1: #{tpu_custom_call.1} parent=0
    #allocation2 [shape = 'u8[32768]{0}', space=vmem, size = 0x8000, scoped, tag = 'input window, operand 0']
    #allocation3 [shape = 's32[2]{0}', space=sflag, size = 0x8, scoped, tag = 'scoped memory for tpu_custom_call.1']
    #allocation4 [shape = 's32[2]{0}', space=sflag, size = 0x8, scoped, tag = 'scoped memory for tpu_custom_call.1']
    #allocation5 [shape = 'u8[32768]{0}', space=vmem, size = 0x8000, scoped, tag = 'input window, operand 1']
    #allocation6 [shape = 's32[2]{0}', space=sflag, size = 0x8, scoped, tag = 'scoped memory for tpu_custom_call.1']
    #allocation7 [shape = 'u8[98304]{0}', space=vmem, size = 0x18000, scoped, tag = 'input window, operand 2, single buffered']
    #allocation8 [shape = 'u8[131072]{0}', space=vmem, size = 0x20000, scoped, tag = 'input window, operand 4, single buffered']
    #allocation9 [shape = 's32[1]{0}', space=sflag, size = 0x4, scoped, tag = 'scoped memory for tpu_custom_call.1']
    #allocation10 [shape = 'u8[196608]{0}', space=vmem, size = 0x30000, scoped, tag = 'output window, operand 0']
    %10 = vsyncpa [#allocation3], 0
    %s11 = scalar_lea.sflag [#allocation3], 1
    %12 = vsyncpa %s11, 0
    %13 = vsyncpa [#allocation6], 0
    %s14 = scalar_lea.sflag [#allocation6], 1
    %15 = vsyncpa %s14, 0
    %16 = vsyncpa [#allocation9], 0
    %17 = vsyncpa [#allocation4], 0
    %s18 = scalar_lea.sflag [#allocation4], 1
    %19 = vsyncpa %s18, 0
    loop: start=0, step=1, limit=6
    $region2: #{tpu_custom_call.1} parent=1 // loop_pre_header
      _
    $region3: #{tpu_custom_call.1} parent=1 // loop_header
      %s21 = sphi 0, %s25
      %p22 = scmp.ge.s32.totalorder %s21, 6
      %s31 = sphi 0, %s33
      %s34 = sphi 0, %s31
      %s35 = sphi 0, %s34
      %s51 = sphi 0, %s35
      %s57 = sphi 0, %s59
      %s60 = sphi 0, %s57
      %s61 = sphi 0, %s60
      %s77 = sphi 0, %s61
      %s81 = sphi 0, %s81
      %s83 = sphi 0, %s81
      %s84 = sphi 0, %s83
      %s98 = sphi 0, %s84
      %s102 = sphi 0, %s102
      %s104 = sphi 0, %s102
      %s105 = sphi 0, %s104
      %s119 = sphi 0, %s105
      %s123 = sphi 0, %s123
      %s125 = sphi 0, %s123
      %s126 = sphi 0, %s125
      %s140 = sphi 0, %s126
      %s146 = sphi 0, %s148
      %s149 = sphi 0, %s146
      %s150 = sphi 0, %s149
      %s166 = sphi 0, %s150
    $region4: #{tpu_custom_call.1} parent=1 // loop_header_branch
      %24 = sbr.rel (%p22) target = $region8
    $region5: #{tpu_custom_call.1} parent=1 // loop_body
      %s26 = ssub.s32 %s21, 1
      %s27 = ssub.s32 %s21, 2
      %s28 = sadd.s32 %s21, 1
      %s29 = ssub.s32 %s21, %s28
      %p30 = scmp.eq.s32.totalorder %s29, 0
      %s32 = sadd.s32 %s31, 1
      %s33 = scalar_select %p30, %s31, %s32
      %p36 = pneg %p30
      %p37 = scmp.eq.s32.totalorder %s21, 3
      %p38 = por %p36, %p37
      %p39 = scmp.ne.s32.totalorder %s31, %s34
      %p40 = scmp.eq.s32.totalorder %s21, 0
      %p41 = por %p39, %p40
      %p42 = scmp.ne.s32.totalorder %s31, %s34
      %p43 = scmp.eq.s32.totalorder %s26, 3
      %p44 = por %p42, %p43
      %p45 = scmp.ne.s32.totalorder %s34, %s35
      %p46 = scmp.eq.s32.totalorder %s26, 0
      %p47 = por %p45, %p46
      %p48 = scmp.ne.s32.totalorder %s34, %s35
      %p49 = scmp.eq.s32.totalorder %s27, 3
      %p50 = por %p48, %p49
      %p52 = scmp.ne.s32.totalorder %s35, %s51
      %p53 = scmp.eq.s32.totalorder %s27, 0
      %p54 = por %p52, %p53
      %s55 = ssub.s32 %s21, %s28
      %p56 = scmp.eq.s32.totalorder %s55, 0
      %s58 = sadd.s32 %s57, 1
      %s59 = scalar_select %p56, %s57, %s58
      %p62 = pneg %p56
      %p63 = scmp.eq.s32.totalorder %s21, 3
      %p64 = por %p62, %p63
      %p65 = scmp.ne.s32.totalorder %s57, %s60
      %p66 = scmp.eq.s32.totalorder %s21, 0
      %p67 = por %p65, %p66
      %p68 = scmp.ne.s32.totalorder %s57, %s60
      %p69 = scmp.eq.s32.totalorder %s26, 3
      %p70 = por %p68, %p69
      %p71 = scmp.ne.s32.totalorder %s60, %s61
      %p72 = scmp.eq.s32.totalorder %s26, 0
      %p73 = por %p71, %p72
      %p74 = scmp.ne.s32.totalorder %s60, %s61
      %p75 = scmp.eq.s32.totalorder %s27, 3
      %p76 = por %p74, %p75
      %p78 = scmp.ne.s32.totalorder %s61, %s77
      %p79 = scmp.eq.s32.totalorder %s27, 0
      %p80 = por %p78, %p79
      %s82 = sadd.s32 %s81, 1
      %p85 = scmp.eq.s32.totalorder %s21, 3
      %p86 = scmp.ne.s32.totalorder %s81, %s83
      %p87 = scmp.eq.s32.totalorder %s21, 0
      %p88 = por %p86, %p87
      %p89 = scmp.ne.s32.totalorder %s81, %s83
      %p90 = scmp.eq.s32.totalorder %s26, 3
      %p91 = por %p89, %p90
      %p92 = scmp.ne.s32.totalorder %s83, %s84
      %p93 = scmp.eq.s32.totalorder %s26, 0
      %p94 = por %p92, %p93
      %p95 = scmp.ne.s32.totalorder %s83, %s84
      %p96 = scmp.eq.s32.totalorder %s27, 3
      %p97 = por %p95, %p96
      %p99 = scmp.ne.s32.totalorder %s84, %s98
      %p100 = scmp.eq.s32.totalorder %s27, 0
      %p101 = por %p99, %p100
      %s103 = sadd.s32 %s102, 1
      %p106 = scmp.eq.s32.totalorder %s21, 3
      %p107 = scmp.ne.s32.totalorder %s102, %s104
      %p108 = scmp.eq.s32.totalorder %s21, 0
      %p109 = por %p107, %p108
      %p110 = scmp.ne.s32.totalorder %s102, %s104
      %p111 = scmp.eq.s32.totalorder %s26, 3
      %p112 = por %p110, %p111
      %p113 = scmp.ne.s32.totalorder %s104, %s105
      %p114 = scmp.eq.s32.totalorder %s26, 0
      %p115 = por %p113, %p114
      %p116 = scmp.ne.s32.totalorder %s104, %s105
      %p117 = scmp.eq.s32.totalorder %s27, 3
      %p118 = por %p116, %p117
      %p120 = scmp.ne.s32.totalorder %s105, %s119
      %p121 = scmp.eq.s32.totalorder %s27, 0
      %p122 = por %p120, %p121
      %s124 = sadd.s32 %s123, 1
      %p127 = scmp.eq.s32.totalorder %s21, 3
      %p128 = scmp.ne.s32.totalorder %s123, %s125
      %p129 = scmp.eq.s32.totalorder %s21, 0
      %p130 = por %p128, %p129
      %p131 = scmp.ne.s32.totalorder %s123, %s125
      %p132 = scmp.eq.s32.totalorder %s26, 3
      %p133 = por %p131, %p132
      %p134 = scmp.ne.s32.totalorder %s125, %s126
      %p135 = scmp.eq.s32.totalorder %s26, 0
      %p136 = por %p134, %p135
      %p137 = scmp.ne.s32.totalorder %s125, %s126
      %p138 = scmp.eq.s32.totalorder %s27, 3
      %p139 = por %p137, %p138
      %p141 = scmp.ne.s32.totalorder %s126, %s140
      %p142 = scmp.eq.s32.totalorder %s27, 0
      %p143 = por %p141, %p142
      %s144 = ssub.s32 %s21, %s28
      %p145 = scmp.eq.s32.totalorder %s144, 0
      %s147 = sadd.s32 %s146, 1
      %s148 = scalar_select %p145, %s146, %s147
      %p151 = pneg %p145
      %p152 = scmp.eq.s32.totalorder %s21, 3
      %p153 = por %p151, %p152
      %p154 = scmp.ne.s32.totalorder %s146, %s149
      %p155 = scmp.eq.s32.totalorder %s21, 0
      %p156 = por %p154, %p155
      %p157 = scmp.ne.s32.totalorder %s146, %s149
      %p158 = scmp.eq.s32.totalorder %s26, 3
      %p159 = por %p157, %p158
      %p160 = scmp.ne.s32.totalorder %s149, %s150
      %p161 = scmp.eq.s32.totalorder %s26, 0
      %p162 = por %p160, %p161
      %p163 = scmp.ne.s32.totalorder %s149, %s150
      %p164 = scmp.eq.s32.totalorder %s27, 3
      %p165 = por %p163, %p164
      %p167 = scmp.ne.s32.totalorder %s150, %s166
      %p168 = scmp.eq.s32.totalorder %s27, 0
      %p169 = por %p167, %p168
      %p170 = scmp.le.s32.totalorder 1, %s21
      %p171 = scmp.lt.s32.totalorder %s21, 5
      %p172 = pnand %p170, %p171
      %p173 = pneg %p172
      // Predicated region
      $region9: #{tpu_custom_call.1} parent=5 // pred_check
        _
      $region10: #{tpu_custom_call.1} parent=5 // pred_check_branch
        %175 = sbr.rel (%p172) target = $region12
      $region11: #{tpu_custom_call.1} parent=5 // pred_region
        %s176 = ssub.s32 %s21, 1
        // Predicated region
        $region13: #{tpu_custom_call.1} parent=11 // pred_check
          %p177 = pneg %p94
        $region14: #{tpu_custom_call.1} parent=11 // pred_check_branch
          %179 = sbr.rel (%p177) target = $region16
        $region15: #{tpu_custom_call.1} parent=11 // pred_region
          %s181 = ssub.s32 3072, 3072
          %182 = vsyncadd [#allocation6], %s181
          %s183 = sshll.u32 [#allocation7], 4
          %s184 = int_to_ptr.vmem [resolvable:$true] %s183
          %189 = dma.hbm_to_vmem [thread:$0]  %s2, 3072, %s184, [#allocation6], 192, 192, 12
        $region16: #{tpu_custom_call.1} parent=11 // pred_fallthru
          _
        // Predicated region
        $region17: #{tpu_custom_call.1} parent=11 // pred_check
          %p190 = pneg %p115
        $region18: #{tpu_custom_call.1} parent=11 // pred_check_branch
          %192 = sbr.rel (%p190) target = $region20
        $region19: #{tpu_custom_call.1} parent=11 // pred_region
          _
        $region20: #{tpu_custom_call.1} parent=11 // pred_fallthru
          _
        // Predicated region
        $region21: #{tpu_custom_call.1} parent=11 // pred_check
          %p193 = pneg %p136
        $region22: #{tpu_custom_call.1} parent=11 // pred_check_branch
          %195 = sbr.rel (%p193) target = $region24
        $region23: #{tpu_custom_call.1} parent=11 // pred_region
          %s197 = ssub.s32 4096, 4096
          %198 = vsyncadd [#allocation9], %s197
          %s199 = sshll.u32 [#allocation8], 4
          %s200 = int_to_ptr.vmem [resolvable:$true] %s199
          %205 = dma.hbm_to_vmem [thread:$0]  %s4, 4096, %s200, [#allocation9], 256, 256, 16
        $region24: #{tpu_custom_call.1} parent=11 // pred_fallthru
          _
      $region12: #{tpu_custom_call.1} parent=5 // pred_fallthru
        _
      %p206 = scmp.lt.s32.totalorder %s21, 4
      // Predicated region
      $region25: #{tpu_custom_call.1} parent=5 // pred_check
        %p207 = pneg %p206
      $region26: #{tpu_custom_call.1} parent=5 // pred_check_branch
        %209 = sbr.rel (%p207) target = $region28
      $region27: #{tpu_custom_call.1} parent=5 // pred_region
        // Predicated region
        $region29: #{tpu_custom_call.1} parent=27 // pred_check
          %p210 = pneg %p41
        $region30: #{tpu_custom_call.1} parent=27 // pred_check_branch
          %212 = sbr.rel (%p210) target = $region32
        $region31: #{tpu_custom_call.1} parent=27 // pred_region
          %s213 = sand.u32 %s31, 1
          %s214 = scalar_lea.sflag [#allocation3], %s213
          %s215 = sand.u32 %s31, 1
          %s216 = smul.addr %s215, 32
          %s217 = scalar_lea.vmem [#allocation2], %s216
          %s218 = smul.u32 8, %s21
          %s220 = ssub.s32 512, 512
          %221 = vsyncadd %s214, %s220
          %s222 = smul.addr %s218, 64
          %s223 = scalar_lea.hbm %s0, %s222
          %s224 = sshll.u32 %s217, 4
          %s225 = int_to_ptr.vmem [resolvable:$true] %s224
          %230 = dma.hbm_to_vmem [thread:$0]  %s223, 512, %s225, %s214, 64, 64, 4
        $region32: #{tpu_custom_call.1} parent=27 // pred_fallthru
          _
        // Predicated region
        $region33: #{tpu_custom_call.1} parent=27 // pred_check
          %p231 = pneg %p67
        $region34: #{tpu_custom_call.1} parent=27 // pred_check_branch
          %233 = sbr.rel (%p231) target = $region36
        $region35: #{tpu_custom_call.1} parent=27 // pred_region
          %s234 = sand.u32 %s21, 1
          %s235 = scalar_lea.sflag [#allocation6], %s234
          %s236 = sand.u32 %s57, 1
          %s237 = smul.addr %s236, 32
          %s238 = scalar_lea.vmem [#allocation5], %s237
          %s239 = smul.u32 8, %s21
          %s241 = ssub.s32 512, 512
          %242 = vsyncadd %s235, %s241
          %s243 = smul.addr %s239, 64
          %s244 = scalar_lea.hbm %s1, %s243
          %s245 = sshll.u32 %s238, 4
          %s246 = int_to_ptr.vmem [resolvable:$true] %s245
          %251 = dma.hbm_to_vmem [thread:$0]  %s244, 512, %s246, %s235, 64, 64, 4
        $region36: #{tpu_custom_call.1} parent=27 // pred_fallthru
          _
      $region28: #{tpu_custom_call.1} parent=5 // pred_fallthru
        _
      %p252 = scmp.le.s32.totalorder 1, %s21
      %p253 = scmp.lt.s32.totalorder %s21, 5
      %p254 = pnand %p252, %p253
      %p255 = pneg %p254
      // Predicated region
      $region37: #{tpu_custom_call.1} parent=5 // pred_check
        _
      $region38: #{tpu_custom_call.1} parent=5 // pred_check_branch
        %257 = sbr.rel (%p254) target = $region40
      $region39: #{tpu_custom_call.1} parent=5 // pred_region
        %s258 = ssub.s32 %s21, 1
        %s259 = sand.u32 %s34, 1
        %s260 = scalar_lea.sflag [#allocation3], %s259
        %s261 = sand.u32 %s34, 1
        %s262 = smul.addr %s261, 32
        %s263 = scalar_lea.vmem [#allocation2], %s262
        // Predicated region
        $region41: #{tpu_custom_call.1} parent=39 // pred_check
          %p264 = pneg %p47
        $region42: #{tpu_custom_call.1} parent=39 // pred_check_branch
          %266 = sbr.rel (%p264) target = $region44
        $region43: #{tpu_custom_call.1} parent=39 // pred_region
          %267 = dma.done %s260, 512
        $region44: #{tpu_custom_call.1} parent=39 // pred_fallthru
          _
        %s268 = sand.u32 %s26, 1
        %s269 = scalar_lea.sflag [#allocation6], %s268
        %s270 = sand.u32 %s60, 1
        %s271 = smul.addr %s270, 32
        %s272 = scalar_lea.vmem [#allocation5], %s271
        // Predicated region
        $region45: #{tpu_custom_call.1} parent=39 // pred_check
          %p273 = pneg %p73
        $region46: #{tpu_custom_call.1} parent=39 // pred_check_branch
          %275 = sbr.rel (%p273) target = $region48
        $region47: #{tpu_custom_call.1} parent=39 // pred_region
          %276 = dma.done %s269, 512
        $region48: #{tpu_custom_call.1} parent=39 // pred_fallthru
          _
        // Predicated region
        $region49: #{tpu_custom_call.1} parent=39 // pred_check
          %p277 = pneg %p94
        $region50: #{tpu_custom_call.1} parent=39 // pred_check_branch
          %279 = sbr.rel (%p277) target = $region52
        $region51: #{tpu_custom_call.1} parent=39 // pred_region
          %280 = dma.done [#allocation6], 3072
        $region52: #{tpu_custom_call.1} parent=39 // pred_fallthru
          _
        // Predicated region
        $region53: #{tpu_custom_call.1} parent=39 // pred_check
          %p281 = pneg %p136
        $region54: #{tpu_custom_call.1} parent=39 // pred_check_branch
          %283 = sbr.rel (%p281) target = $region56
        $region55: #{tpu_custom_call.1} parent=39 // pred_region
          %284 = dma.done [#allocation9], 4096
        $region56: #{tpu_custom_call.1} parent=39 // pred_fallthru
          _
        %s285 = sand.u32 %s34, 1
        %s286 = scalar_lea.sflag [#allocation3], %s285
        %s287 = sand.u32 %s34, 1
        %s288 = smul.addr %s287, 32
        %s289 = scalar_lea.vmem [#allocation2], %s288
        %p290 = pneg %p47
        %p291 = pneg %p44
        %s292 = sand.u32 %s26, 1
        %s293 = scalar_lea.sflag [#allocation6], %s292
        %s294 = sand.u32 %s60, 1
        %s295 = smul.addr %s294, 32
        %s296 = scalar_lea.vmem [#allocation5], %s295
        %p297 = pneg %p73
        %p298 = pneg %p70
        %p299 = pneg %p94
        %p300 = pneg %p91
        %p301 = pneg %p115
        %p302 = pneg %p112
        %p303 = pneg %p136
        %p304 = pneg %p133
        %p305 = pneg %p162
        %p306 = pneg %p159
        %s307 = sand.u32 %s149, 1
        %s308 = scalar_lea.sflag [#allocation4], %s307
        %s309 = sand.u32 %s149, 1
        %s310 = smul.addr %s309, 192
        %s311 = scalar_lea.vmem [#allocation10], %s310
        %s312 = smul.u32 8, %s26
        %s313 = smul.u32 8, %s26
        %s314 = smul.u32 8, %s26
        %v316 = vld [vmem:[%s263] sm:$0xf]
        %v317 = vld [vmem:[%s263 + $0x4] sm:$0xf]
        %v318 = vld [vmem:[%s263 + $0x8] sm:$0xf]
        %v319 = vld [vmem:[%s263 + $0xc] sm:$0xf]
        %v320 = vld [vmem:[%s263 + $0x10] sm:$0xf]
        %v321 = vld [vmem:[%s263 + $0x14] sm:$0xf]
        %v322 = vld [vmem:[%s263 + $0x18] sm:$0xf]
        %v323 = vld [vmem:[%s263 + $0x1c] sm:$0xf]
        %v324 = vld [vmem:[#allocation7] sm:$0xff]
        %v325 = vld [vmem:[#allocation7 + $0x8] sm:$0xf]
        %v326 = vld [vmem:[#allocation7 + $0xc] sm:$0xff]
        %v327 = vld [vmem:[#allocation7 + $0x14] sm:$0xf]
        %v328 = vld [vmem:[#allocation7 + $0x18] sm:$0xff]
        %v329 = vld [vmem:[#allocation7 + $0x20] sm:$0xf]
        %v330 = vld [vmem:[#allocation7 + $0x24] sm:$0xff]
        %v331 = vld [vmem:[#allocation7 + $0x2c] sm:$0xf]
        %v332 = vld [vmem:[#allocation7 + $0x30] sm:$0xff]
        %v333 = vld [vmem:[#allocation7 + $0x38] sm:$0xf]
        %v334 = vld [vmem:[#allocation7 + $0x3c] sm:$0xff]
        %v335 = vld [vmem:[#allocation7 + $0x44] sm:$0xf]
        %v336 = vld [vmem:[#allocation7 + $0x48] sm:$0xff]
        %v337 = vld [vmem:[#allocation7 + $0x50] sm:$0xf]
        %v338 = vld [vmem:[#allocation7 + $0x54] sm:$0xff]
        %v339 = vld [vmem:[#allocation7 + $0x5c] sm:$0xf]
        %v340 = vld [vmem:[#allocation7 + $0x60] sm:$0xff]
        %v341 = vld [vmem:[#allocation7 + $0x68] sm:$0xf]
        %v342 = vld [vmem:[#allocation7 + $0x6c] sm:$0xff]
        %v343 = vld [vmem:[#allocation7 + $0x74] sm:$0xf]
        %v344 = vld [vmem:[#allocation7 + $0x78] sm:$0xff]
        %v345 = vld [vmem:[#allocation7 + $0x80] sm:$0xf]
        %v346 = vld [vmem:[#allocation7 + $0x84] sm:$0xff]
        %v347 = vld [vmem:[#allocation7 + $0x8c] sm:$0xf]
        %v348 = vld [vmem:[#allocation7 + $0x90] sm:$0xff]
        %v349 = vld [vmem:[#allocation7 + $0x98] sm:$0xf]
        %v350 = vld [vmem:[#allocation7 + $0x9c] sm:$0xff]
        %v351 = vld [vmem:[#allocation7 + $0xa4] sm:$0xf]
        %v352 = vld [vmem:[#allocation7 + $0xa8] sm:$0xff]
        %v353 = vld [vmem:[#allocation7 + $0xb0] sm:$0xf]
        %v354 = vld [vmem:[#allocation7 + $0xb4] sm:$0xff]
        %v355 = vld [vmem:[#allocation7 + $0xbc] sm:$0xf]
        %v356 = vld [vmem:[%s3] sm:$0x7]
        %v358 = vlaneseq
        %v359 = vshrl.u32 %v358, 7
        %v360 = vsub.s32 0, %v359
        %v361 = vrot.slane %v356, %v360
        %v362 = vlaneseq
        %v363 = vshrl.u32 %v362, 7
        %v364 = vsub.s32 1, %v363
        %v365 = vrot.slane %v356, %v364
        %v366 = vlaneseq
        %v367 = vshrl.u32 %v366, 7
        %v368 = vsub.s32 2, %v367
        %v369 = vrot.slane %v356, %v368
        %v381 = vunpack.c.l.b16 %v316
        %v382 = vunpack.c.l.b16 %v317
        %v383 = vunpack.c.l.b16 %v318
        %v384 = vunpack.c.l.b16 %v319
        %v385 = vunpack.c.l.b16 %v320
        %v386 = vunpack.c.l.b16 %v321
        %v387 = vunpack.c.l.b16 %v322
        %v388 = vunpack.c.l.b16 %v323
        %v389 = vpack.c.b16 %v382, %v381
        %v390 = vpack.c.b16 %v384, %v383
        %v391 = vpack.c.b16 %v386, %v385
        %v392 = vpack.c.b16 %v388, %v387
        %v429 = vunpack.c.l.b16 %v324
        %v430 = vunpack.c.h.b16 %v324
        %v431 = vunpack.c.l.b16 %v325
        %v432 = vunpack.c.l.b16 %v326
        %v433 = vunpack.c.h.b16 %v326
        %v434 = vunpack.c.l.b16 %v327
        %v435 = vunpack.c.l.b16 %v328
        %v436 = vunpack.c.h.b16 %v328
        %v437 = vunpack.c.l.b16 %v329
        %v438 = vunpack.c.l.b16 %v330
        %v439 = vunpack.c.h.b16 %v330
        %v440 = vunpack.c.l.b16 %v331
        %v441 = vunpack.c.l.b16 %v332
        %v442 = vunpack.c.h.b16 %v332
        %v443 = vunpack.c.l.b16 %v333
        %v444 = vunpack.c.l.b16 %v334
        %v445 = vunpack.c.h.b16 %v334
        %v446 = vunpack.c.l.b16 %v335
        %v447 = vunpack.c.l.b16 %v336
        %v448 = vunpack.c.h.b16 %v336
        %v449 = vunpack.c.l.b16 %v337
        %v450 = vunpack.c.l.b16 %v338
        %v451 = vunpack.c.h.b16 %v338
        %v452 = vunpack.c.l.b16 %v339
        %v453 = vunpack.c.l.b16 %v340
        %v454 = vunpack.c.h.b16 %v340
        %v455 = vunpack.c.l.b16 %v341
        %v456 = vunpack.c.l.b16 %v342
        %v457 = vunpack.c.h.b16 %v342
        %v458 = vunpack.c.l.b16 %v343
        %v459 = vunpack.c.l.b16 %v344
        %v460 = vunpack.c.h.b16 %v344
        %v461 = vunpack.c.l.b16 %v345
        %v462 = vunpack.c.l.b16 %v346
        %v463 = vunpack.c.h.b16 %v346
        %v464 = vunpack.c.l.b16 %v347
        %v465 = vunpack.c.l.b16 %v348
        %v466 = vunpack.c.h.b16 %v348
        %v467 = vunpack.c.l.b16 %v349
        %v468 = vunpack.c.l.b16 %v350
        %v469 = vunpack.c.h.b16 %v350
        %v470 = vunpack.c.l.b16 %v351
        %v471 = vunpack.c.l.b16 %v352
        %v472 = vunpack.c.h.b16 %v352
        %v473 = vunpack.c.l.b16 %v353
        %v474 = vunpack.c.l.b16 %v354
        %v475 = vunpack.c.h.b16 %v354
        %v476 = vunpack.c.l.b16 %v355
        %v477 = vpack.c.b16 %v432, %v429
        %v478 = vpack.c.b16 %v433, %v430
        %v479 = vpack.c.b16 %v434, %v431
        %v480 = vpack.c.b16 %v438, %v435
        %v481 = vpack.c.b16 %v439, %v436
        %v482 = vpack.c.b16 %v440, %v437
        %v483 = vpack.c.b16 %v444, %v441
        %v484 = vpack.c.b16 %v445, %v442
        %v485 = vpack.c.b16 %v446, %v443
        %v486 = vpack.c.b16 %v450, %v447
        %v487 = vpack.c.b16 %v451, %v448
        %v488 = vpack.c.b16 %v452, %v449
        %v489 = vpack.c.b16 %v456, %v453
        %v490 = vpack.c.b16 %v457, %v454
        %v491 = vpack.c.b16 %v458, %v455
        %v492 = vpack.c.b16 %v462, %v459
        %v493 = vpack.c.b16 %v463, %v460
        %v494 = vpack.c.b16 %v464, %v461
        %v495 = vpack.c.b16 %v468, %v465
        %v496 = vpack.c.b16 %v469, %v466
        %v497 = vpack.c.b16 %v470, %v467
        %v498 = vpack.c.b16 %v474, %v471
        %v499 = vpack.c.b16 %v475, %v472
        %v500 = vpack.c.b16 %v476, %v473
        %525 = vmatprep.subr.bf16.mxu0 %v499
        %526 = vmatpush1.bf16.msra.mxu0 %v498
        %527 = vmatprep.subr.bf16.mxu0 %v496
        %528 = vmatpush1.bf16.msra.mxu0 %v495
        %529 = vmatprep.subr.bf16.mxu0 %v493
        %530 = vmatpush1.bf16.msra.mxu0 %v492
        %531 = vmatprep.subr.bf16.mxu0 %v490
        %532 = vmatpush1.bf16.msra.mxu0 %v489
        %533 = vmatprep.subr.bf16.mxu0 %v487
        %534 = vmatpush1.bf16.msra.mxu0 %v486
        %535 = vmatprep.subr.bf16.mxu0 %v484
        %536 = vmatpush1.bf16.msra.mxu0 %v483
        %537 = vmatprep.subr.bf16.mxu0 %v481
        %538 = vmatpush1.bf16.msra.mxu0 %v480
        %539 = vmatprep.subr.bf16.mxu0 %v478
        %540 = vmatpush1.bf16.msra.mxu0 %v477
        %541 = vmatprep.subr.bf16.mxu0 0
        %542 = vmatpush2.bf16.msra.mxu0 0
        %543 = vmatprep.subr.bf16.mxu0 0
        %544 = vmatpush2.bf16.msra.mxu0 0
        %545 = vmatprep.subr.bf16.mxu0 0
        %546 = vmatpush2.bf16.msra.mxu0 0
        %547 = vmatprep.subr.bf16.mxu0 0
        %548 = vmatpush2.bf16.msra.mxu0 0
        %549 = vmatprep.subr.bf16.mxu0 0
        %550 = vmatpush2.bf16.msra.mxu0 0
        %551 = vmatprep.subr.bf16.mxu0 0
        %552 = vmatpush2.bf16.msra.mxu0 0
        %553 = vmatprep.subr.bf16.mxu0 0
        %554 = vmatpush2.bf16.msra.mxu0 0
        %555 = vmatprep.subr.bf16.mxu0 0
        %556 = vmatpush2.bf16.msra.mxu0 0
        %557 = vmatprep.mubr.bf16.mxu0 0
        %558 = vmatmul.mubr.bf16.gmra.mxu0 %v389
        %v559 = vpop.f32.mrf.mxu0
        %v560 = vadd.f32 %v361, %v559
        %v561 = vpop.f32.mrf.mxu0
        %v562 = vadd.f32 %v365, %v561
        %v563 = vpop.f32.mrf.mxu0
        %v564 = vadd.f32 %v361, %v563
        %v565 = vpop.f32.mrf.mxu0
        %v566 = vadd.f32 %v365, %v565
        %567 = vmatprep.mubr.bf16.mxu0 0
        %568 = vmatmul.mubr.bf16.gmra.mxu0 %v390
        %v569 = vpop.f32.mrf.mxu0
        %v570 = vadd.f32 %v361, %v569
        %v571 = vpop.f32.mrf.mxu0
        %v572 = vadd.f32 %v365, %v571
        %v573 = vpop.f32.mrf.mxu0
        %v574 = vadd.f32 %v361, %v573
        %v575 = vpop.f32.mrf.mxu0
        %v576 = vadd.f32 %v365, %v575
        %577 = vmatprep.mubr.bf16.mxu0 0
        %578 = vmatmul.mubr.bf16.gmra.mxu0 %v391
        %v579 = vpop.f32.mrf.mxu0
        %v580 = vadd.f32 %v361, %v579
        %v581 = vpop.f32.mrf.mxu0
        %v582 = vadd.f32 %v365, %v581
        %v583 = vpop.f32.mrf.mxu0
        %v584 = vadd.f32 %v361, %v583
        %v585 = vpop.f32.mrf.mxu0
        %v586 = vadd.f32 %v365, %v585
        %587 = vmatprep.mubr.bf16.mxu0 0
        %588 = vmatmul.mubr.bf16.gmra.mxu0 %v392
        %v589 = vpop.f32.mrf.mxu0
        %v590 = vadd.f32 %v361, %v589
        %v591 = vpop.f32.mrf.mxu0
        %v592 = vadd.f32 %v365, %v591
        %v593 = vpop.f32.mrf.mxu0
        %v594 = vadd.f32 %v361, %v593
        %v595 = vpop.f32.mrf.mxu0
        %v596 = vadd.f32 %v365, %v595
        %597 = vdwg.mxu0
        %598 = vmatprep.subr.bf16.mxu0 0
        %599 = vmatpush1.bf16.msra.mxu0 %v500
        %600 = vmatprep.subr.bf16.mxu0 0
        %601 = vmatpush1.bf16.msra.mxu0 %v497
        %602 = vmatprep.subr.bf16.mxu0 0
        %603 = vmatpush1.bf16.msra.mxu0 %v494
        %604 = vmatprep.subr.bf16.mxu0 0
        %605 = vmatpush1.bf16.msra.mxu0 %v491
        %606 = vmatprep.subr.bf16.mxu0 0
        %607 = vmatpush1.bf16.msra.mxu0 %v488
        %608 = vmatprep.subr.bf16.mxu0 0
        %609 = vmatpush1.bf16.msra.mxu0 %v485
        %610 = vmatprep.subr.bf16.mxu0 0
        %611 = vmatpush1.bf16.msra.mxu0 %v482
        %612 = vmatprep.subr.bf16.mxu0 0
        %613 = vmatpush1.bf16.msra.mxu0 %v479
        %614 = vmatprep.subr.bf16.mxu0 0
        %615 = vmatpush2.bf16.msra.mxu0 0
        %616 = vmatprep.subr.bf16.mxu0 0
        %617 = vmatpush2.bf16.msra.mxu0 0
        %618 = vmatprep.subr.bf16.mxu0 0
        %619 = vmatpush2.bf16.msra.mxu0 0
        %620 = vmatprep.subr.bf16.mxu0 0
        %621 = vmatpush2.bf16.msra.mxu0 0
        %622 = vmatprep.subr.bf16.mxu0 0
        %623 = vmatpush2.bf16.msra.mxu0 0
        %624 = vmatprep.subr.bf16.mxu0 0
        %625 = vmatpush2.bf16.msra.mxu0 0
        %626 = vmatprep.subr.bf16.mxu0 0
        %627 = vmatpush2.bf16.msra.mxu0 0
        %628 = vmatprep.subr.bf16.mxu0 0
        %629 = vmatpush2.bf16.msra.mxu0 0
        %630 = vmatprep.mubr.bf16.mxu0 0
        %631 = vmatmul.mubr.bf16.gmra.mxu0 %v389
        %v632 = vpop.f32.mrf.mxu0
        %v633 = vadd.f32 %v369, %v632
        %v634 = vpop.f32.mrf.mxu0
        %v635 = vpop.f32.mrf.mxu0
        %v636 = vadd.f32 %v369, %v635
        %v637 = vpop.f32.mrf.mxu0
        %638 = vmatprep.mubr.bf16.mxu0 0
        %639 = vmatmul.mubr.bf16.gmra.mxu0 %v390
        %v640 = vpop.f32.mrf.mxu0
        %v641 = vadd.f32 %v369, %v640
        %v642 = vpop.f32.mrf.mxu0
        %v643 = vpop.f32.mrf.mxu0
        %v644 = vadd.f32 %v369, %v643
        %v645 = vpop.f32.mrf.mxu0
        %646 = vmatprep.mubr.bf16.mxu0 0
        %647 = vmatmul.mubr.bf16.gmra.mxu0 %v391
        %v648 = vpop.f32.mrf.mxu0
        %v649 = vadd.f32 %v369, %v648
        %v650 = vpop.f32.mrf.mxu0
        %v651 = vpop.f32.mrf.mxu0
        %v652 = vadd.f32 %v369, %v651
        %v653 = vpop.f32.mrf.mxu0
        %654 = vmatprep.mubr.bf16.mxu0 0
        %655 = vmatmul.mubr.bf16.gmra.mxu0 %v392
        %v656 = vpop.f32.mrf.mxu0
        %v657 = vadd.f32 %v369, %v656
        %v658 = vpop.f32.mrf.mxu0
        %v659 = vpop.f32.mrf.mxu0
        %v660 = vadd.f32 %v369, %v659
        %v661 = vpop.f32.mrf.mxu0
        %662 = vdwg.mxu0
        %v663 = vxor.u32 %v633, 2147483648
        %v664 = vxor.u32 %v636, 2147483648
        %v665 = vxor.u32 %v641, 2147483648
        %v666 = vxor.u32 %v644, 2147483648
        %v667 = vxor.u32 %v649, 2147483648
        %v668 = vxor.u32 %v652, 2147483648
        %v669 = vxor.u32 %v657, 2147483648
        %v670 = vxor.u32 %v660, 2147483648
        %v671 = vmul.f32 %v663, 1.442695
        %v672 = vpow.pop %v671
        %v673 = vmul.f32 %v664, 1.442695
        %v674 = vpow.pop %v673
        %v675 = vmul.f32 %v665, 1.442695
        %v676 = vpow.pop %v675
        %v677 = vmul.f32 %v666, 1.442695
        %v678 = vpow.pop %v677
        %v679 = vmul.f32 %v667, 1.442695
        %v680 = vpow.pop %v679
        %v681 = vmul.f32 %v668, 1.442695
        %v682 = vpow.pop %v681
        %v683 = vmul.f32 %v669, 1.442695
        %v684 = vpow.pop %v683
        %v685 = vmul.f32 %v670, 1.442695
        %v686 = vpow.pop %v685
        %v687 = vadd.f32 %v672, 1.0
        %v688 = vadd.f32 %v674, 1.0
        %v689 = vadd.f32 %v676, 1.0
        %v690 = vadd.f32 %v678, 1.0
        %v691 = vadd.f32 %v680, 1.0
        %v692 = vadd.f32 %v682, 1.0
        %v693 = vadd.f32 %v684, 1.0
        %v694 = vadd.f32 %v686, 1.0
        %v695 = vrcp.pop %v687
        %v696 = vmul.f32 1.0, %v695
        %v697 = vrcp.pop %v688
        %v698 = vmul.f32 1.0, %v697
        %v699 = vrcp.pop %v689
        %v700 = vmul.f32 1.0, %v699
        %v701 = vrcp.pop %v690
        %v702 = vmul.f32 1.0, %v701
        %v703 = vrcp.pop %v691
        %v704 = vmul.f32 1.0, %v703
        %v705 = vrcp.pop %v692
        %v706 = vmul.f32 1.0, %v705
        %v707 = vrcp.pop %v693
        %v708 = vmul.f32 1.0, %v707
        %v709 = vrcp.pop %v694
        %v710 = vmul.f32 1.0, %v709
        %v711 = vmax.f32 %v560, %v562
        %712 = vmax.xlane.f32.xlu0 %v711
        %v713 = vpop.xlane.xlu0 %712
        %v714 = vmax.f32 %v564, %v566
        %715 = vmax.xlane.f32.xlu0 %v714
        %v716 = vpop.xlane.xlu0 %715
        %v717 = vmax.f32 %v570, %v572
        %718 = vmax.xlane.f32.xlu0 %v717
        %v719 = vpop.xlane.xlu0 %718
        %v720 = vmax.f32 %v574, %v576
        %721 = vmax.xlane.f32.xlu0 %v720
        %v722 = vpop.xlane.xlu0 %721
        %v723 = vmax.f32 %v580, %v582
        %724 = vmax.xlane.f32.xlu0 %v723
        %v725 = vpop.xlane.xlu0 %724
        %v726 = vmax.f32 %v584, %v586
        %727 = vmax.xlane.f32.xlu0 %v726
        %v728 = vpop.xlane.xlu0 %727
        %v729 = vmax.f32 %v590, %v592
        %730 = vmax.xlane.f32.xlu0 %v729
        %v731 = vpop.xlane.xlu0 %730
        %v732 = vmax.f32 %v594, %v596
        %733 = vmax.xlane.f32.xlu0 %v732
        %v734 = vpop.xlane.xlu0 %733
        %v735 = vsub.f32 %v560, %v713
        %v736 = vsub.f32 %v562, %v713
        %v737 = vsub.f32 %v564, %v716
        %v738 = vsub.f32 %v566, %v716
        %v739 = vsub.f32 %v570, %v719
        %v740 = vsub.f32 %v572, %v719
        %v741 = vsub.f32 %v574, %v722
        %v742 = vsub.f32 %v576, %v722
        %v743 = vsub.f32 %v580, %v725
        %v744 = vsub.f32 %v582, %v725
        %v745 = vsub.f32 %v584, %v728
        %v746 = vsub.f32 %v586, %v728
        %v747 = vsub.f32 %v590, %v731
        %v748 = vsub.f32 %v592, %v731
        %v749 = vsub.f32 %v594, %v734
        %v750 = vsub.f32 %v596, %v734
        %v751 = vmul.f32 %v735, 1.442695
        %v752 = vpow.pop %v751
        %v753 = vmul.f32 %v736, 1.442695
        %v754 = vpow.pop %v753
        %v755 = vmul.f32 %v737, 1.442695
        %v756 = vpow.pop %v755
        %v757 = vmul.f32 %v738, 1.442695
        %v758 = vpow.pop %v757
        %v759 = vmul.f32 %v739, 1.442695
        %v760 = vpow.pop %v759
        %v761 = vmul.f32 %v740, 1.442695
        %v762 = vpow.pop %v761
        %v763 = vmul.f32 %v741, 1.442695
        %v764 = vpow.pop %v763
        %v765 = vmul.f32 %v742, 1.442695
        %v766 = vpow.pop %v765
        %v767 = vmul.f32 %v743, 1.442695
        %v768 = vpow.pop %v767
        %v769 = vmul.f32 %v744, 1.442695
        %v770 = vpow.pop %v769
        %v771 = vmul.f32 %v745, 1.442695
        %v772 = vpow.pop %v771
        %v773 = vmul.f32 %v746, 1.442695
        %v774 = vpow.pop %v773
        %v775 = vmul.f32 %v747, 1.442695
        %v776 = vpow.pop %v775
        %v777 = vmul.f32 %v748, 1.442695
        %v778 = vpow.pop %v777
        %v779 = vmul.f32 %v749, 1.442695
        %v780 = vpow.pop %v779
        %v781 = vmul.f32 %v750, 1.442695
        %v782 = vpow.pop %v781
        %v783 = vadd.f32 %v752, %v754
        %784 = vadd.xlane.f32.xlu0 %v783
        %v785 = vpop.xlane.xlu0 %784
        %v786 = vadd.f32 %v756, %v758
        %787 = vadd.xlane.f32.xlu0 %v786
        %v788 = vpop.xlane.xlu0 %787
        %v789 = vadd.f32 %v760, %v762
        %790 = vadd.xlane.f32.xlu0 %v789
        %v791 = vpop.xlane.xlu0 %790
        %v792 = vadd.f32 %v764, %v766
        %793 = vadd.xlane.f32.xlu0 %v792
        %v794 = vpop.xlane.xlu0 %793
        %v795 = vadd.f32 %v768, %v770
        %796 = vadd.xlane.f32.xlu0 %v795
        %v797 = vpop.xlane.xlu0 %796
        %v798 = vadd.f32 %v772, %v774
        %799 = vadd.xlane.f32.xlu0 %v798
        %v800 = vpop.xlane.xlu0 %799
        %v801 = vadd.f32 %v776, %v778
        %802 = vadd.xlane.f32.xlu0 %v801
        %v803 = vpop.xlane.xlu0 %802
        %v804 = vadd.f32 %v780, %v782
        %805 = vadd.xlane.f32.xlu0 %v804
        %v806 = vpop.xlane.xlu0 %805
        %v807 = vrcp.pop %v785
        %v808 = vrcp.pop %v788
        %v809 = vrcp.pop %v791
        %v810 = vrcp.pop %v794
        %v811 = vrcp.pop %v797
        %v812 = vrcp.pop %v800
        %v813 = vrcp.pop %v803
        %v814 = vrcp.pop %v806
        %v815 = vsub.f32 1.0, %v696
        %v816 = vsub.f32 1.0, %v698
        %v817 = vsub.f32 1.0, %v700
        %v818 = vsub.f32 1.0, %v702
        %v819 = vsub.f32 1.0, %v704
        %v820 = vsub.f32 1.0, %v706
        %v821 = vsub.f32 1.0, %v708
        %v822 = vsub.f32 1.0, %v710
        %v823 = vmul.f32 %v815, %v807
        %v824 = vmul.f32 %v816, %v808
        %v825 = vmul.f32 %v817, %v809
        %v826 = vmul.f32 %v818, %v810
        %v827 = vmul.f32 %v819, %v811
        %v828 = vmul.f32 %v820, %v812
        %v829 = vmul.f32 %v821, %v813
        %v830 = vmul.f32 %v822, %v814
        %832 = vset.pattern.permute.xlu0 0
        %833 = vperm.xlu0 %832, %v823
        %v834 = vpop.permute.xlu0 %833
        %837 = vset.pattern.permute.xlu0 0
        %838 = vperm.xlu0 %837, %v824
        %v839 = vpop.permute.xlu0 %838
        %842 = vset.pattern.permute.xlu0 0
        %843 = vperm.xlu0 %842, %v825
        %v844 = vpop.permute.xlu0 %843
        %847 = vset.pattern.permute.xlu0 0
        %848 = vperm.xlu0 %847, %v826
        %v849 = vpop.permute.xlu0 %848
        %852 = vset.pattern.permute.xlu0 0
        %853 = vperm.xlu0 %852, %v827
        %v854 = vpop.permute.xlu0 %853
        %857 = vset.pattern.permute.xlu0 0
        %858 = vperm.xlu0 %857, %v828
        %v859 = vpop.permute.xlu0 %858
        %862 = vset.pattern.permute.xlu0 0
        %863 = vperm.xlu0 %862, %v829
        %v864 = vpop.permute.xlu0 %863
        %867 = vset.pattern.permute.xlu0 0
        %868 = vperm.xlu0 %867, %v830
        %v869 = vpop.permute.xlu0 %868
        %v871 = vmul.f32 %v752, %v834
        %v872 = vmul.f32 %v754, %v834
        %v873 = vmul.f32 %v756, %v839
        %v874 = vmul.f32 %v758, %v839
        %v875 = vmul.f32 %v760, %v844
        %v876 = vmul.f32 %v762, %v844
        %v877 = vmul.f32 %v764, %v849
        %v878 = vmul.f32 %v766, %v849
        %v879 = vmul.f32 %v768, %v854
        %v880 = vmul.f32 %v770, %v854
        %v881 = vmul.f32 %v772, %v859
        %v882 = vmul.f32 %v774, %v859
        %v883 = vmul.f32 %v776, %v864
        %v884 = vmul.f32 %v778, %v864
        %v885 = vmul.f32 %v780, %v869
        %v886 = vmul.f32 %v782, %v869
        %887 = vst [vmem:[%s311] sm:$0xff] %v871
        %888 = vst [vmem:[%s311 + $0x8] sm:$0xff] %v872
        %889 = vst [vmem:[%s311 + $0x18] sm:$0xff] %v873
        %890 = vst [vmem:[%s311 + $0x20] sm:$0xff] %v874
        %891 = vst [vmem:[%s311 + $0x30] sm:$0xff] %v875
        %892 = vst [vmem:[%s311 + $0x38] sm:$0xff] %v876
        %893 = vst [vmem:[%s311 + $0x48] sm:$0xff] %v877
        %894 = vst [vmem:[%s311 + $0x50] sm:$0xff] %v878
        %895 = vst [vmem:[%s311 + $0x60] sm:$0xff] %v879
        %896 = vst [vmem:[%s311 + $0x68] sm:$0xff] %v880
        %897 = vst [vmem:[%s311 + $0x78] sm:$0xff] %v881
        %898 = vst [vmem:[%s311 + $0x80] sm:$0xff] %v882
        %899 = vst [vmem:[%s311 + $0x90] sm:$0xff] %v883
        %900 = vst [vmem:[%s311 + $0x98] sm:$0xff] %v884
        %901 = vst [vmem:[%s311 + $0xa8] sm:$0xff] %v885
        %902 = vst [vmem:[%s311 + $0xb0] sm:$0xff] %v886
        %v903 = vld [vmem:[%s272] sm:$0xf]
        %v904 = vld [vmem:[%s272 + $0x4] sm:$0xf]
        %v905 = vld [vmem:[%s272 + $0x8] sm:$0xf]
        %v906 = vld [vmem:[%s272 + $0xc] sm:$0xf]
        %v907 = vld [vmem:[%s272 + $0x10] sm:$0xf]
        %v908 = vld [vmem:[%s272 + $0x14] sm:$0xf]
        %v909 = vld [vmem:[%s272 + $0x18] sm:$0xf]
        %v910 = vld [vmem:[%s272 + $0x1c] sm:$0xf]
        %v911 = vld [vmem:[#allocation8] sm:$0xff]
        %v912 = vld [vmem:[#allocation8 + $0x8] sm:$0xff]
        %v913 = vld [vmem:[#allocation8 + $0x10] sm:$0xff]
        %v914 = vld [vmem:[#allocation8 + $0x18] sm:$0xff]
        %v915 = vld [vmem:[#allocation8 + $0x20] sm:$0xff]
        %v916 = vld [vmem:[#allocation8 + $0x28] sm:$0xff]
        %v917 = vld [vmem:[#allocation8 + $0x30] sm:$0xff]
        %v918 = vld [vmem:[#allocation8 + $0x38] sm:$0xff]
        %v919 = vld [vmem:[#allocation8 + $0x40] sm:$0xff]
        %v920 = vld [vmem:[#allocation8 + $0x48] sm:$0xff]
        %v921 = vld [vmem:[#allocation8 + $0x50] sm:$0xff]
        %v922 = vld [vmem:[#allocation8 + $0x58] sm:$0xff]
        %v923 = vld [vmem:[#allocation8 + $0x60] sm:$0xff]
        %v924 = vld [vmem:[#allocation8 + $0x68] sm:$0xff]
        %v925 = vld [vmem:[#allocation8 + $0x70] sm:$0xff]
        %v926 = vld [vmem:[#allocation8 + $0x78] sm:$0xff]
        %v927 = vld [vmem:[#allocation8 + $0x80] sm:$0xff]
        %v928 = vld [vmem:[#allocation8 + $0x88] sm:$0xff]
        %v929 = vld [vmem:[#allocation8 + $0x90] sm:$0xff]
        %v930 = vld [vmem:[#allocation8 + $0x98] sm:$0xff]
        %v931 = vld [vmem:[#allocation8 + $0xa0] sm:$0xff]
        %v932 = vld [vmem:[#allocation8 + $0xa8] sm:$0xff]
        %v933 = vld [vmem:[#allocation8 + $0xb0] sm:$0xff]
        %v934 = vld [vmem:[#allocation8 + $0xb8] sm:$0xff]
        %v935 = vld [vmem:[#allocation8 + $0xc0] sm:$0xff]
        %v936 = vld [vmem:[#allocation8 + $0xc8] sm:$0xff]
        %v937 = vld [vmem:[#allocation8 + $0xd0] sm:$0xff]
        %v938 = vld [vmem:[#allocation8 + $0xd8] sm:$0xff]
        %v939 = vld [vmem:[#allocation8 + $0xe0] sm:$0xff]
        %v940 = vld [vmem:[#allocation8 + $0xe8] sm:$0xff]
        %v941 = vld [vmem:[#allocation8 + $0xf0] sm:$0xff]
        %v942 = vld [vmem:[#allocation8 + $0xf8] sm:$0xff]
        %v951 = vunpack.c.l.b16 %v903
        %v952 = vunpack.c.l.b16 %v904
        %v953 = vunpack.c.l.b16 %v905
        %v954 = vunpack.c.l.b16 %v906
        %v955 = vunpack.c.l.b16 %v907
        %v956 = vunpack.c.l.b16 %v908
        %v957 = vunpack.c.l.b16 %v909
        %v958 = vunpack.c.l.b16 %v910
        %v959 = vpack.c.b16 %v952, %v951
        %v960 = vpack.c.b16 %v954, %v953
        %v961 = vpack.c.b16 %v956, %v955
        %v962 = vpack.c.b16 %v958, %v957
        %v999 = vunpack.c.l.b16 %v911
        %v1000 = vunpack.c.h.b16 %v911
        %v1001 = vunpack.c.l.b16 %v912
        %v1002 = vunpack.c.h.b16 %v912
        %v1003 = vunpack.c.l.b16 %v913
        %v1004 = vunpack.c.h.b16 %v913
        %v1005 = vunpack.c.l.b16 %v914
        %v1006 = vunpack.c.h.b16 %v914
        %v1007 = vunpack.c.l.b16 %v915
        %v1008 = vunpack.c.h.b16 %v915
        %v1009 = vunpack.c.l.b16 %v916
        %v1010 = vunpack.c.h.b16 %v916
        %v1011 = vunpack.c.l.b16 %v917
        %v1012 = vunpack.c.h.b16 %v917
        %v1013 = vunpack.c.l.b16 %v918
        %v1014 = vunpack.c.h.b16 %v918
        %v1015 = vunpack.c.l.b16 %v919
        %v1016 = vunpack.c.h.b16 %v919
        %v1017 = vunpack.c.l.b16 %v920
        %v1018 = vunpack.c.h.b16 %v920
        %v1019 = vunpack.c.l.b16 %v921
        %v1020 = vunpack.c.h.b16 %v921
        %v1021 = vunpack.c.l.b16 %v922
        %v1022 = vunpack.c.h.b16 %v922
        %v1023 = vunpack.c.l.b16 %v923
        %v1024 = vunpack.c.h.b16 %v923
        %v1025 = vunpack.c.l.b16 %v924
        %v1026 = vunpack.c.h.b16 %v924
        %v1027 = vunpack.c.l.b16 %v925
        %v1028 = vunpack.c.h.b16 %v925
        %v1029 = vunpack.c.l.b16 %v926
        %v1030 = vunpack.c.h.b16 %v926
        %v1031 = vunpack.c.l.b16 %v927
        %v1032 = vunpack.c.h.b16 %v927
        %v1033 = vunpack.c.l.b16 %v928
        %v1034 = vunpack.c.h.b16 %v928
        %v1035 = vunpack.c.l.b16 %v929
        %v1036 = vunpack.c.h.b16 %v929
        %v1037 = vunpack.c.l.b16 %v930
        %v1038 = vunpack.c.h.b16 %v930
        %v1039 = vunpack.c.l.b16 %v931
        %v1040 = vunpack.c.h.b16 %v931
        %v1041 = vunpack.c.l.b16 %v932
        %v1042 = vunpack.c.h.b16 %v932
        %v1043 = vunpack.c.l.b16 %v933
        %v1044 = vunpack.c.h.b16 %v933
        %v1045 = vunpack.c.l.b16 %v934
        %v1046 = vunpack.c.h.b16 %v934
        %v1047 = vunpack.c.l.b16 %v935
        %v1048 = vunpack.c.h.b16 %v935
        %v1049 = vunpack.c.l.b16 %v936
        %v1050 = vunpack.c.h.b16 %v936
        %v1051 = vunpack.c.l.b16 %v937
        %v1052 = vunpack.c.h.b16 %v937
        %v1053 = vunpack.c.l.b16 %v938
        %v1054 = vunpack.c.h.b16 %v938
        %v1055 = vunpack.c.l.b16 %v939
        %v1056 = vunpack.c.h.b16 %v939
        %v1057 = vunpack.c.l.b16 %v940
        %v1058 = vunpack.c.h.b16 %v940
        %v1059 = vunpack.c.l.b16 %v941
        %v1060 = vunpack.c.h.b16 %v941
        %v1061 = vunpack.c.l.b16 %v942
        %v1062 = vunpack.c.h.b16 %v942
        %v1063 = vpack.c.b16 %v1003, %v999
        %v1064 = vpack.c.b16 %v1004, %v1000
        %v1065 = vpack.c.b16 %v1005, %v1001
        %v1066 = vpack.c.b16 %v1006, %v1002
        %v1067 = vpack.c.b16 %v1011, %v1007
        %v1068 = vpack.c.b16 %v1012, %v1008
        %v1069 = vpack.c.b16 %v1013, %v1009
        %v1070 = vpack.c.b16 %v1014, %v1010
        %v1071 = vpack.c.b16 %v1019, %v1015
        %v1072 = vpack.c.b16 %v1020, %v1016
        %v1073 = vpack.c.b16 %v1021, %v1017
        %v1074 = vpack.c.b16 %v1022, %v1018
        %v1075 = vpack.c.b16 %v1027, %v1023
        %v1076 = vpack.c.b16 %v1028, %v1024
        %v1077 = vpack.c.b16 %v1029, %v1025
        %v1078 = vpack.c.b16 %v1030, %v1026
        %v1079 = vpack.c.b16 %v1035, %v1031
        %v1080 = vpack.c.b16 %v1036, %v1032
        %v1081 = vpack.c.b16 %v1037, %v1033
        %v1082 = vpack.c.b16 %v1038, %v1034
        %v1083 = vpack.c.b16 %v1043, %v1039
        %v1084 = vpack.c.b16 %v1044, %v1040
        %v1085 = vpack.c.b16 %v1045, %v1041
        %v1086 = vpack.c.b16 %v1046, %v1042
        %v1087 = vpack.c.b16 %v1051, %v1047
        %v1088 = vpack.c.b16 %v1052, %v1048
        %v1089 = vpack.c.b16 %v1053, %v1049
        %v1090 = vpack.c.b16 %v1054, %v1050
        %v1091 = vpack.c.b16 %v1059, %v1055
        %v1092 = vpack.c.b16 %v1060, %v1056
        %v1093 = vpack.c.b16 %v1061, %v1057
        %v1094 = vpack.c.b16 %v1062, %v1058
        %1127 = vmatprep.subr.bf16.mxu0 %v1092
        %1128 = vmatpush1.bf16.msra.mxu0 %v1091
        %1129 = vmatprep.subr.bf16.mxu0 %v1088
        %1130 = vmatpush1.bf16.msra.mxu0 %v1087
        %1131 = vmatprep.subr.bf16.mxu0 %v1084
        %1132 = vmatpush1.bf16.msra.mxu0 %v1083
        %1133 = vmatprep.subr.bf16.mxu0 %v1080
        %1134 = vmatpush1.bf16.msra.mxu0 %v1079
        %1135 = vmatprep.subr.bf16.mxu0 %v1076
        %1136 = vmatpush1.bf16.msra.mxu0 %v1075
        %1137 = vmatprep.subr.bf16.mxu0 %v1072
        %1138 = vmatpush1.bf16.msra.mxu0 %v1071
        %1139 = vmatprep.subr.bf16.mxu0 %v1068
        %1140 = vmatpush1.bf16.msra.mxu0 %v1067
        %1141 = vmatprep.subr.bf16.mxu0 %v1064
        %1142 = vmatpush1.bf16.msra.mxu0 %v1063
        %1143 = vmatprep.subr.bf16.mxu0 0
        %1144 = vmatpush2.bf16.msra.mxu0 0
        %1145 = vmatprep.subr.bf16.mxu0 0
        %1146 = vmatpush2.bf16.msra.mxu0 0
        %1147 = vmatprep.subr.bf16.mxu0 0
        %1148 = vmatpush2.bf16.msra.mxu0 0
        %1149 = vmatprep.subr.bf16.mxu0 0
        %1150 = vmatpush2.bf16.msra.mxu0 0
        %1151 = vmatprep.subr.bf16.mxu0 0
        %1152 = vmatpush2.bf16.msra.mxu0 0
        %1153 = vmatprep.subr.bf16.mxu0 0
        %1154 = vmatpush2.bf16.msra.mxu0 0
        %1155 = vmatprep.subr.bf16.mxu0 0
        %1156 = vmatpush2.bf16.msra.mxu0 0
        %1157 = vmatprep.subr.bf16.mxu0 0
        %1158 = vmatpush2.bf16.msra.mxu0 0
        %1159 = vmatprep.mubr.bf16.mxu0 0
        %1160 = vmatmul.mubr.bf16.gmra.mxu0 %v959
        %v1161 = vpop.f32.mrf.mxu0
        %v1162 = vadd.f32 0.0, %v1161
        %v1163 = vpop.f32.mrf.mxu0
        %v1164 = vadd.f32 0.0, %v1163
        %v1165 = vpop.f32.mrf.mxu0
        %v1166 = vadd.f32 0.0, %v1165
        %v1167 = vpop.f32.mrf.mxu0
        %v1168 = vadd.f32 0.0, %v1167
        %1169 = vmatprep.mubr.bf16.mxu0 0
        %1170 = vmatmul.mubr.bf16.gmra.mxu0 %v960
        %v1171 = vpop.f32.mrf.mxu0
        %v1172 = vadd.f32 0.0, %v1171
        %v1173 = vpop.f32.mrf.mxu0
        %v1174 = vadd.f32 0.0, %v1173
        %v1175 = vpop.f32.mrf.mxu0
        %v1176 = vadd.f32 0.0, %v1175
        %v1177 = vpop.f32.mrf.mxu0
        %v1178 = vadd.f32 0.0, %v1177
        %1179 = vmatprep.mubr.bf16.mxu0 0
        %1180 = vmatmul.mubr.bf16.gmra.mxu0 %v961
        %v1181 = vpop.f32.mrf.mxu0
        %v1182 = vadd.f32 0.0, %v1181
        %v1183 = vpop.f32.mrf.mxu0
        %v1184 = vadd.f32 0.0, %v1183
        %v1185 = vpop.f32.mrf.mxu0
        %v1186 = vadd.f32 0.0, %v1185
        %v1187 = vpop.f32.mrf.mxu0
        %v1188 = vadd.f32 0.0, %v1187
        %1189 = vmatprep.mubr.bf16.mxu0 0
        %1190 = vmatmul.mubr.bf16.gmra.mxu0 %v962
        %v1191 = vpop.f32.mrf.mxu0
        %v1192 = vadd.f32 0.0, %v1191
        %v1193 = vpop.f32.mrf.mxu0
        %v1194 = vadd.f32 0.0, %v1193
        %v1195 = vpop.f32.mrf.mxu0
        %v1196 = vadd.f32 0.0, %v1195
        %v1197 = vpop.f32.mrf.mxu0
        %v1198 = vadd.f32 0.0, %v1197
        %1199 = vdwg.mxu0
        %1200 = vmatprep.subr.bf16.mxu0 %v1094
        %1201 = vmatpush1.bf16.msra.mxu0 %v1093
        %1202 = vmatprep.subr.bf16.mxu0 %v1090
        %1203 = vmatpush1.bf16.msra.mxu0 %v1089
        %1204 = vmatprep.subr.bf16.mxu0 %v1086
        %1205 = vmatpush1.bf16.msra.mxu0 %v1085
        %1206 = vmatprep.subr.bf16.mxu0 %v1082
        %1207 = vmatpush1.bf16.msra.mxu0 %v1081
        %1208 = vmatprep.subr.bf16.mxu0 %v1078
        %1209 = vmatpush1.bf16.msra.mxu0 %v1077
        %1210 = vmatprep.subr.bf16.mxu0 %v1074
        %1211 = vmatpush1.bf16.msra.mxu0 %v1073
        %1212 = vmatprep.subr.bf16.mxu0 %v1070
        %1213 = vmatpush1.bf16.msra.mxu0 %v1069
        %1214 = vmatprep.subr.bf16.mxu0 %v1066
        %1215 = vmatpush1.bf16.msra.mxu0 %v1065
        %1216 = vmatprep.subr.bf16.mxu0 0
        %1217 = vmatpush2.bf16.msra.mxu0 0
        %1218 = vmatprep.subr.bf16.mxu0 0
        %1219 = vmatpush2.bf16.msra.mxu0 0
        %1220 = vmatprep.subr.bf16.mxu0 0
        %1221 = vmatpush2.bf16.msra.mxu0 0
        %1222 = vmatprep.subr.bf16.mxu0 0
        %1223 = vmatpush2.bf16.msra.mxu0 0
        %1224 = vmatprep.subr.bf16.mxu0 0
        %1225 = vmatpush2.bf16.msra.mxu0 0
        %1226 = vmatprep.subr.bf16.mxu0 0
        %1227 = vmatpush2.bf16.msra.mxu0 0
        %1228 = vmatprep.subr.bf16.mxu0 0
        %1229 = vmatpush2.bf16.msra.mxu0 0
        %1230 = vmatprep.subr.bf16.mxu0 0
        %1231 = vmatpush2.bf16.msra.mxu0 0
        %1232 = vmatprep.mubr.bf16.mxu0 0
        %1233 = vmatmul.mubr.bf16.gmra.mxu0 %v959
        %v1234 = vpop.f32.mrf.mxu0
        %v1235 = vadd.f32 0.0, %v1234
        %v1236 = vpop.f32.mrf.mxu0
        %v1237 = vadd.f32 0.0, %v1236
        %v1238 = vpop.f32.mrf.mxu0
        %v1239 = vadd.f32 0.0, %v1238
        %v1240 = vpop.f32.mrf.mxu0
        %v1241 = vadd.f32 0.0, %v1240
        %1242 = vmatprep.mubr.bf16.mxu0 0
        %1243 = vmatmul.mubr.bf16.gmra.mxu0 %v960
        %v1244 = vpop.f32.mrf.mxu0
        %v1245 = vadd.f32 0.0, %v1244
        %v1246 = vpop.f32.mrf.mxu0
        %v1247 = vadd.f32 0.0, %v1246
        %v1248 = vpop.f32.mrf.mxu0
        %v1249 = vadd.f32 0.0, %v1248
        %v1250 = vpop.f32.mrf.mxu0
        %v1251 = vadd.f32 0.0, %v1250
        %1252 = vmatprep.mubr.bf16.mxu0 0
        %1253 = vmatmul.mubr.bf16.gmra.mxu0 %v961
        %v1254 = vpop.f32.mrf.mxu0
        %v1255 = vadd.f32 0.0, %v1254
        %v1256 = vpop.f32.mrf.mxu0
        %v1257 = vadd.f32 0.0, %v1256
        %v1258 = vpop.f32.mrf.mxu0
        %v1259 = vadd.f32 0.0, %v1258
        %v1260 = vpop.f32.mrf.mxu0
        %v1261 = vadd.f32 0.0, %v1260
        %1262 = vmatprep.mubr.bf16.mxu0 0
        %1263 = vmatmul.mubr.bf16.gmra.mxu0 %v962
        %v1264 = vpop.f32.mrf.mxu0
        %v1265 = vadd.f32 0.0, %v1264
        %v1266 = vpop.f32.mrf.mxu0
        %v1267 = vadd.f32 0.0, %v1266
        %v1268 = vpop.f32.mrf.mxu0
        %v1269 = vadd.f32 0.0, %v1268
        %v1270 = vpop.f32.mrf.mxu0
        %v1271 = vadd.f32 0.0, %v1270
        %1272 = vdwg.mxu0
        %s1273 = smul.u32 %s26, 64
        %v1274 = vlaneseq
        %v1275 = vshrl.u32 %v1274, 7
        %v1276 = vadd.s32 %v1275, 8
        %v1277 = vadd.s32 %v1275, 16
        %v1278 = vadd.s32 %v1275, 24
        %v1279 = vadd.s32 %v1275, 32
        %v1280 = vadd.s32 %v1275, 40
        %v1281 = vadd.s32 %v1275, 48
        %v1282 = vadd.s32 %v1275, 56
        %v1283 = vstv %s1273
        %v1284 = vadd.s32 %v1283, %v1275
        %v1285 = vadd.s32 %v1283, %v1276
        %v1286 = vadd.s32 %v1283, %v1277
        %v1287 = vadd.s32 %v1283, %v1278
        %v1288 = vadd.s32 %v1283, %v1279
        %v1289 = vadd.s32 %v1283, %v1280
        %v1290 = vadd.s32 %v1283, %v1281
        %v1291 = vadd.s32 %v1283, %v1282
        %vm1292 = vcmp.lt.s32.totalorder %v1284, 0
        %v1293 = vsub.s32 0, %v1284
        %v1294 = vsel %vm1292, %v1293, %v1284
        %v1295 = vshrl.u32 %v1294, 2
        %v1296 = vand.u32 %v1294, 3
        %v1297 = vsub.s32 0, %v1296
        %v1298 = vsel %vm1292, %v1297, %v1296
        %vm1299 = vcmp.lt.s32.totalorder %v1285, 0
        %v1300 = vsub.s32 0, %v1285
        %v1301 = vsel %vm1299, %v1300, %v1285
        %v1302 = vshrl.u32 %v1301, 2
        %v1303 = vand.u32 %v1301, 3
        %v1304 = vsub.s32 0, %v1303
        %v1305 = vsel %vm1299, %v1304, %v1303
        %vm1306 = vcmp.lt.s32.totalorder %v1286, 0
        %v1307 = vsub.s32 0, %v1286
        %v1308 = vsel %vm1306, %v1307, %v1286
        %v1309 = vshrl.u32 %v1308, 2
        %v1310 = vand.u32 %v1308, 3
        %v1311 = vsub.s32 0, %v1310
        %v1312 = vsel %vm1306, %v1311, %v1310
        %vm1313 = vcmp.lt.s32.totalorder %v1287, 0
        %v1314 = vsub.s32 0, %v1287
        %v1315 = vsel %vm1313, %v1314, %v1287
        %v1316 = vshrl.u32 %v1315, 2
        %v1317 = vand.u32 %v1315, 3
        %v1318 = vsub.s32 0, %v1317
        %v1319 = vsel %vm1313, %v1318, %v1317
        %vm1320 = vcmp.lt.s32.totalorder %v1288, 0
        %v1321 = vsub.s32 0, %v1288
        %v1322 = vsel %vm1320, %v1321, %v1288
        %v1323 = vshrl.u32 %v1322, 2
        %v1324 = vand.u32 %v1322, 3
        %v1325 = vsub.s32 0, %v1324
        %v1326 = vsel %vm1320, %v1325, %v1324
        %vm1327 = vcmp.lt.s32.totalorder %v1289, 0
        %v1328 = vsub.s32 0, %v1289
        %v1329 = vsel %vm1327, %v1328, %v1289
        %v1330 = vshrl.u32 %v1329, 2
        %v1331 = vand.u32 %v1329, 3
        %v1332 = vsub.s32 0, %v1331
        %v1333 = vsel %vm1327, %v1332, %v1331
        %vm1334 = vcmp.lt.s32.totalorder %v1290, 0
        %v1335 = vsub.s32 0, %v1290
        %v1336 = vsel %vm1334, %v1335, %v1290
        %v1337 = vshrl.u32 %v1336, 2
        %v1338 = vand.u32 %v1336, 3
        %v1339 = vsub.s32 0, %v1338
        %v1340 = vsel %vm1334, %v1339, %v1338
        %vm1341 = vcmp.lt.s32.totalorder %v1291, 0
        %v1342 = vsub.s32 0, %v1291
        %v1343 = vsel %vm1341, %v1342, %v1291
        %v1344 = vshrl.u32 %v1343, 2
        %v1345 = vand.u32 %v1343, 3
        %v1346 = vsub.s32 0, %v1345
        %v1347 = vsel %vm1341, %v1346, %v1345
        %vm1348 = vcmp.ne.s32.totalorder %v1298, 0
        %vm1349 = vcmp.ne.s32.totalorder %v1305, 0
        %vm1350 = vcmp.ne.s32.totalorder %v1312, 0
        %vm1351 = vcmp.ne.s32.totalorder %v1319, 0
        %vm1352 = vcmp.ne.s32.totalorder %v1326, 0
        %vm1353 = vcmp.ne.s32.totalorder %v1333, 0
        %vm1354 = vcmp.ne.s32.totalorder %v1340, 0
        %vm1355 = vcmp.ne.s32.totalorder %v1347, 0
        %vm1356 = vcmp.lt.s32.totalorder %v1298, 0
        %vm1357 = vcmp.lt.s32.totalorder %v1305, 0
        %vm1358 = vcmp.lt.s32.totalorder %v1312, 0
        %vm1359 = vcmp.lt.s32.totalorder %v1319, 0
        %vm1360 = vcmp.lt.s32.totalorder %v1326, 0
        %vm1361 = vcmp.lt.s32.totalorder %v1333, 0
        %vm1362 = vcmp.lt.s32.totalorder %v1340, 0
        %vm1363 = vcmp.lt.s32.totalorder %v1347, 0
        %vm1364 = vmand %vm1356, %vm1348
        %vm1365 = vmand %vm1357, %vm1349
        %vm1366 = vmand %vm1358, %vm1350
        %vm1367 = vmand %vm1359, %vm1351
        %vm1368 = vmand %vm1360, %vm1352
        %vm1369 = vmand %vm1361, %vm1353
        %vm1370 = vmand %vm1362, %vm1354
        %vm1371 = vmand %vm1363, %vm1355
        %v1372 = vadd.s32 %v1298, 4
        %v1373 = vadd.s32 %v1305, 4
        %v1374 = vadd.s32 %v1312, 4
        %v1375 = vadd.s32 %v1319, 4
        %v1376 = vadd.s32 %v1326, 4
        %v1377 = vadd.s32 %v1333, 4
        %v1378 = vadd.s32 %v1340, 4
        %v1379 = vadd.s32 %v1347, 4
        %v1380 = vsel %vm1364, %v1372, %v1298
        %v1381 = vsel %vm1365, %v1373, %v1305
        %v1382 = vsel %vm1366, %v1374, %v1312
        %v1383 = vsel %vm1367, %v1375, %v1319
        %v1384 = vsel %vm1368, %v1376, %v1326
        %v1385 = vsel %vm1369, %v1377, %v1333
        %v1386 = vsel %vm1370, %v1378, %v1340
        %v1387 = vsel %vm1371, %v1379, %v1347
        %vm1388 = vcmp.eq.s32.totalorder %v1380, 1
        %vm1389 = vcmp.eq.s32.totalorder %v1381, 1
        %vm1390 = vcmp.eq.s32.totalorder %v1382, 1
        %vm1391 = vcmp.eq.s32.totalorder %v1383, 1
        %vm1392 = vcmp.eq.s32.totalorder %v1384, 1
        %vm1393 = vcmp.eq.s32.totalorder %v1385, 1
        %vm1394 = vcmp.eq.s32.totalorder %v1386, 1
        %vm1395 = vcmp.eq.s32.totalorder %v1387, 1
        %v1396 = vsel %vm1388, 1, 0
        %v1397 = vsel %vm1389, 1, 0
        %v1398 = vsel %vm1390, 1, 0
        %v1399 = vsel %vm1391, 1, 0
        %v1400 = vsel %vm1392, 1, 0
        %v1401 = vsel %vm1393, 1, 0
        %v1402 = vsel %vm1394, 1, 0
        %v1403 = vsel %vm1395, 1, 0
        %vm1404 = vcmp.eq.s32.totalorder %v1396, 1
        %vm1405 = vcmp.eq.s32.totalorder %v1397, 1
        %vm1406 = vcmp.eq.s32.totalorder %v1398, 1
        %vm1407 = vcmp.eq.s32.totalorder %v1399, 1
        %vm1408 = vcmp.eq.s32.totalorder %v1400, 1
        %vm1409 = vcmp.eq.s32.totalorder %v1401, 1
        %vm1410 = vcmp.eq.s32.totalorder %v1402, 1
        %vm1411 = vcmp.eq.s32.totalorder %v1403, 1
        %v1412 = vsel %vm1404, %v1164, %v1162
        %v1413 = vsel %vm1405, %v1168, %v1166
        %v1414 = vsel %vm1406, %v1174, %v1172
        %v1415 = vsel %vm1407, %v1178, %v1176
        %v1416 = vsel %vm1408, %v1184, %v1182
        %v1417 = vsel %vm1409, %v1188, %v1186
        %v1418 = vsel %vm1410, %v1194, %v1192
        %v1419 = vsel %vm1411, %v1198, %v1196
        %vm1420 = vcmp.eq.s32.totalorder %v1380, 2
        %vm1421 = vcmp.eq.s32.totalorder %v1381, 2
        %vm1422 = vcmp.eq.s32.totalorder %v1382, 2
        %vm1423 = vcmp.eq.s32.totalorder %v1383, 2
        %vm1424 = vcmp.eq.s32.totalorder %v1384, 2
        %vm1425 = vcmp.eq.s32.totalorder %v1385, 2
        %vm1426 = vcmp.eq.s32.totalorder %v1386, 2
        %vm1427 = vcmp.eq.s32.totalorder %v1387, 2
        %v1428 = vsel %vm1420, 1, 0
        %v1429 = vsel %vm1421, 1, 0
        %v1430 = vsel %vm1422, 1, 0
        %v1431 = vsel %vm1423, 1, 0
        %v1432 = vsel %vm1424, 1, 0
        %v1433 = vsel %vm1425, 1, 0
        %v1434 = vsel %vm1426, 1, 0
        %v1435 = vsel %vm1427, 1, 0
        %vm1436 = vcmp.eq.s32.totalorder %v1428, 1
        %vm1437 = vcmp.eq.s32.totalorder %v1429, 1
        %vm1438 = vcmp.eq.s32.totalorder %v1430, 1
        %vm1439 = vcmp.eq.s32.totalorder %v1431, 1
        %vm1440 = vcmp.eq.s32.totalorder %v1432, 1
        %vm1441 = vcmp.eq.s32.totalorder %v1433, 1
        %vm1442 = vcmp.eq.s32.totalorder %v1434, 1
        %vm1443 = vcmp.eq.s32.totalorder %v1435, 1
        %v1444 = vsel %vm1436, %v1235, %v1412
        %v1445 = vsel %vm1437, %v1239, %v1413
        %v1446 = vsel %vm1438, %v1245, %v1414
        %v1447 = vsel %vm1439, %v1249, %v1415
        %v1448 = vsel %vm1440, %v1255, %v1416
        %v1449 = vsel %vm1441, %v1259, %v1417
        %v1450 = vsel %vm1442, %v1265, %v1418
        %v1451 = vsel %vm1443, %v1269, %v1419
        %vm1452 = vcmp.eq.s32.totalorder %v1380, 3
        %vm1453 = vcmp.eq.s32.totalorder %v1381, 3
        %vm1454 = vcmp.eq.s32.totalorder %v1382, 3
        %vm1455 = vcmp.eq.s32.totalorder %v1383, 3
        %vm1456 = vcmp.eq.s32.totalorder %v1384, 3
        %vm1457 = vcmp.eq.s32.totalorder %v1385, 3
        %vm1458 = vcmp.eq.s32.totalorder %v1386, 3
        %vm1459 = vcmp.eq.s32.totalorder %v1387, 3
        %v1460 = vsel %vm1452, 1, 0
        %v1461 = vsel %vm1453, 1, 0
        %v1462 = vsel %vm1454, 1, 0
        %v1463 = vsel %vm1455, 1, 0
        %v1464 = vsel %vm1456, 1, 0
        %v1465 = vsel %vm1457, 1, 0
        %v1466 = vsel %vm1458, 1, 0
        %v1467 = vsel %vm1459, 1, 0
        %vm1468 = vcmp.eq.s32.totalorder %v1460, 1
        %vm1469 = vcmp.eq.s32.totalorder %v1461, 1
        %vm1470 = vcmp.eq.s32.totalorder %v1462, 1
        %vm1471 = vcmp.eq.s32.totalorder %v1463, 1
        %vm1472 = vcmp.eq.s32.totalorder %v1464, 1
        %vm1473 = vcmp.eq.s32.totalorder %v1465, 1
        %vm1474 = vcmp.eq.s32.totalorder %v1466, 1
        %vm1475 = vcmp.eq.s32.totalorder %v1467, 1
        %v1476 = vsel %vm1468, %v1237, %v1444
        %v1477 = vsel %vm1469, %v1241, %v1445
        %v1478 = vsel %vm1470, %v1247, %v1446
        %v1479 = vsel %vm1471, %v1251, %v1447
        %v1480 = vsel %vm1472, %v1257, %v1448
        %v1481 = vsel %vm1473, %v1261, %v1449
        %v1482 = vsel %vm1474, %v1267, %v1450
        %v1483 = vsel %vm1475, %v1271, %v1451
        %1485 = vset.pattern.permute.xlu0 0
        %1486 = vperm.xlu0 %1485, %v696
        %v1487 = vpop.permute.xlu0 %1486
        %1490 = vset.pattern.permute.xlu0 0
        %1491 = vperm.xlu0 %1490, %v698
        %v1492 = vpop.permute.xlu0 %1491
        %1495 = vset.pattern.permute.xlu0 0
        %1496 = vperm.xlu0 %1495, %v700
        %v1497 = vpop.permute.xlu0 %1496
        %1500 = vset.pattern.permute.xlu0 0
        %1501 = vperm.xlu0 %1500, %v702
        %v1502 = vpop.permute.xlu0 %1501
        %1505 = vset.pattern.permute.xlu0 0
        %1506 = vperm.xlu0 %1505, %v704
        %v1507 = vpop.permute.xlu0 %1506
        %1510 = vset.pattern.permute.xlu0 0
        %1511 = vperm.xlu0 %1510, %v706
        %v1512 = vpop.permute.xlu0 %1511
        %1515 = vset.pattern.permute.xlu0 0
        %1516 = vperm.xlu0 %1515, %v708
        %v1517 = vpop.permute.xlu0 %1516
        %1520 = vset.pattern.permute.xlu0 0
        %1521 = vperm.xlu0 %1520, %v710
        %v1522 = vpop.permute.xlu0 %1521
        %v1524 = vmul.f32 %v1476, %v1487
        %v1525 = vmul.f32 %v1477, %v1492
        %v1526 = vmul.f32 %v1478, %v1497
        %v1527 = vmul.f32 %v1479, %v1502
        %v1528 = vmul.f32 %v1480, %v1507
        %v1529 = vmul.f32 %v1481, %v1512
        %v1530 = vmul.f32 %v1482, %v1517
        %v1531 = vmul.f32 %v1483, %v1522
        %1532 = vst [vmem:[%s311 + $0x10] sm:$0xff] %v1524
        %1533 = vst [vmem:[%s311 + $0x28] sm:$0xff] %v1525
        %1534 = vst [vmem:[%s311 + $0x40] sm:$0xff] %v1526
        %1535 = vst [vmem:[%s311 + $0x58] sm:$0xff] %v1527
        %1536 = vst [vmem:[%s311 + $0x70] sm:$0xff] %v1528
        %1537 = vst [vmem:[%s311 + $0x88] sm:$0xff] %v1529
        %1538 = vst [vmem:[%s311 + $0xa0] sm:$0xff] %v1530
        %1539 = vst [vmem:[%s311 + $0xb8] sm:$0xff] %v1531
        %s1540 = sand.u32 %s149, 1
        %s1541 = scalar_lea.sflag [#allocation4], %s1540
        %s1542 = sand.u32 %s149, 1
        %s1543 = smul.addr %s1542, 192
        %s1544 = scalar_lea.vmem [#allocation10], %s1543
        // Predicated region
        $region57: #{tpu_custom_call.1} parent=39 // pred_check
          %p1545 = pneg %p159
        $region58: #{tpu_custom_call.1} parent=39 // pred_check_branch
          %1547 = sbr.rel (%p1545) target = $region60
        $region59: #{tpu_custom_call.1} parent=39 // pred_region
          %s1548 = smul.u32 8, %s26
          %s1550 = ssub.s32 3072, 3072
          %1551 = vsyncadd %s1541, %s1550
          %s1552 = smul.addr %s1548, 3
          %s1553 = smul.addr %s1552, 128
          %s1554 = scalar_lea.hbm %s5, %s1553
          %s1555 = sshll.u32 %s1544, 4
          %s1556 = int_to_ptr.vmem [resolvable:$true] %s1555
          %1561 = dma.vmem_to_hbm [thread:$0]  %s1556, 3072, %s1554, %s1541, 384, 384, 24
        $region60: #{tpu_custom_call.1} parent=39 // pred_fallthru
          _
      $region40: #{tpu_custom_call.1} parent=5 // pred_fallthru
        _
      %p1562 = scmp.le.s32.totalorder 2, %s21
      // Predicated region
      $region61: #{tpu_custom_call.1} parent=5 // pred_check
        %p1563 = pneg %p1562
      $region62: #{tpu_custom_call.1} parent=5 // pred_check_branch
        %1565 = sbr.rel (%p1563) target = $region64
      $region63: #{tpu_custom_call.1} parent=5 // pred_region
        %s1566 = ssub.s32 %s21, 2
        // Predicated region
        $region65: #{tpu_custom_call.1} parent=63 // pred_check
          %p1567 = pneg %p165
        $region66: #{tpu_custom_call.1} parent=63 // pred_check_branch
          %1569 = sbr.rel (%p1567) target = $region68
        $region67: #{tpu_custom_call.1} parent=63 // pred_region
          %s1570 = sand.u32 %s150, 1
          %s1571 = scalar_lea.sflag [#allocation4], %s1570
          %s1572 = sand.u32 %s150, 1
          %s1573 = smul.addr %s1572, 192
          %s1574 = scalar_lea.vmem [#allocation10], %s1573
          %1575 = dma.done %s1571, 3072
        $region68: #{tpu_custom_call.1} parent=63 // pred_fallthru
          _
      $region64: #{tpu_custom_call.1} parent=5 // pred_fallthru
        _
    $region6: #{tpu_custom_call.1} parent=1 // loop_footer
      %s25 = sadd.s32 1, %s21
    $region7: #{tpu_custom_call.1} parent=1 // loop_footer_branch
      %20 = sbr.rel target = $region3
    $region8: #{tpu_custom_call.1} parent=1 // loop_exit
      _
    %1576 = vsyncpa [#allocation3], 1
    %s1577 = scalar_lea.sflag [#allocation3], 1
    %1578 = vsyncpa %s1577, 1
    %1579 = vsyncpa [#allocation6], 1
    %s1580 = scalar_lea.sflag [#allocation6], 1
    %1581 = vsyncpa %s1580, 1
    %1582 = vsyncpa [#allocation9], 1
    %1583 = vsyncpa [#allocation4], 1
    %s1584 = scalar_lea.sflag [#allocation4], 1
    %1585 = vsyncpa %s1584, 1

</llo_original>
